<compile_context>
chip_gen: v6e
topology: v6e:2x2x1
jax: 0.10.0
libtpu: 0.0.40
codegen_flags: <defaults>
</compile_context>

<pallas_src>
import jax
import jax.numpy as jnp
from jax.experimental import pallas as pl
from jax.experimental.pallas import tpu as pltpu


# --------------------------------------------------------------------------------------
# Fused Pallas kernel: all InvertedResidual blocks, B images per grid step, (C, HW) slabs.
# --------------------------------------------------------------------------------------
def _make_fused_kernel(H, W, ksize, block_dims, mask_index, images_per_step):
    HW = H * W
    pad = ksize // 2
    k2 = ksize * ksize

    def kernel(masks_ref, x_ref, *rest):
        *prm_refs, o_ref = rest

        masks = masks_ref[...]                                   # (4*pad, HW) f32 {0,1}

        def mrow(kind, d):
            i = mask_index[(kind, d)]
            return masks[i:i + 1, :]                             # (1, HW)

        # Load every (tiny, resident) parameter once; shared across blocks loop and all images this step.
        blocks = []
        for bi, (C_in_b, C_mid, C_se, C_out_b) in enumerate(block_dims):
            w_pw_ref, pk_ref, b_ser_ref, w_pwl_ref, b3_ref = prm_refs[5 * bi:5 * bi + 5]
            pk = pk_ref[...]                                     # (C_mid, 3 + k2 + 2*C_se)
            blocks.append(dict(
                dims=(C_in_b, C_mid, C_se, C_out_b),
                w_pw=w_pw_ref[...],                              # (C_mid, C_in_b)  BN1-folded
                b1=pk[:, 0:1],                                   # (C_mid, 1)
                w_dw=pk[:, 1:1 + k2],                            # (C_mid, k2)      BN2-folded
                b2=pk[:, 1 + k2:2 + k2],                         # (C_mid, 1)
                b_see=pk[:, 2 + k2:3 + k2],                      # (C_mid, 1)
                w_ser=pk[:, 3 + k2:3 + k2 + C_se],               # (C_mid, C_se)
                w_see=pk[:, 3 + k2 + C_se:3 + k2 + 2 * C_se],    # (C_mid, C_se)
                b_ser=b_ser_ref[...],                            # (1, C_se)
                w_pwl=w_pwl_ref[...],                            # (C_out_b, C_mid) BN3-folded
                b3=b3_ref[...],                                  # (C_out_b, 1)
            ))

        def run_block(x_img, blk):
            C_in_b, C_mid, C_se, C_out_b = blk["dims"]

            # ---- 1x1 pointwise expansion (MXU); bias + swish on VPU/EUP. ----
            h = jnp.dot(blk["w_pw"], x_img, preferred_element_type=jnp.float32)   # (C_mid, HW)
            h = h + blk["b1"]
            h = h * jax.nn.sigmoid(h)

            # ---- k x k depthwise conv, stride 1, 'same': XLU lane rolls + precomputed masks. ----
            w_dw = blk["w_dw"]
            acc = jnp.zeros((C_mid, HW), jnp.float32)
            for di in range(ksize):
                dh = di - pad
                row = h if dh == 0 else pltpu.roll(h, shift=(-dh * W) % HW, axis=1)
                if dh != 0:
                    row = row * mrow('r', dh)                    # row mask applied once per dh
                for dj in range(ksize):
                    dw = dj - pad
                    v = row if dw == 0 else pltpu.roll(row, shift=(-dw) % HW, axis=1)
                    if dw != 0:
                        v = v * mrow('c', dw)                    # col mask only
                    tap = w_dw[:, di * ksize + dj:di * ksize + dj + 1]   # (C_mid, 1)
                    acc = acc + v * tap
            d = acc + blk["b2"]
            d = d * jax.nn.sigmoid(d)

            # ---- Squeeze-and-Excite: lane reduce (XLU) + two tiny VPU contractions (no MXU). ----
            se_mean = jnp.mean(d, axis=1, keepdims=True)                              # (C_mid, 1)
            se_r = jnp.sum(blk["w_ser"] * se_mean, axis=0, keepdims=True) + blk["b_ser"]   # (1, C_se)
            se_r = se_r * jax.nn.sigmoid(se_r)
            se_e = jnp.sum(blk["w_see"] * se_r, axis=1, keepdims=True) + blk["b_see"]       # (C_mid, 1)
            d = d * jax.nn.sigmoid(se_e)

            # ---- 1x1 pointwise linear projection (MXU); bias (+ residual) on VPU. ----
            out = jnp.dot(blk["w_pwl"], d, preferred_element_type=jnp.float32) + blk["b3"]  # (C_out, HW)
            if C_in_b == C_out_b:                                # stride is always 1 here
                out = out + x_img
            return out

        for b in range(images_per_step):
            act = x_ref[b]                                       # (C_in, HW)
            for blk in blocks:
                act = run_block(act, blk)
            o_ref[b] = act                                       # lane-dense (C_out, HW) store

    return kernel


# --------------------------------------------------------------------------------------
# Wrapper: NCHW in / NCHW out, ONE pallas_call for the whole EfficientNetBlock.
# --------------------------------------------------------------------------------------
def efficientnet_block_pallas(x_nchw, blocks_params, ksize=3):
    N, C_in, H, W = x_nchw.shape
    HW = H * W
    pad = ksize // 2
    k2 = ksize * ksize

    # ---- Fold BN scales into conv weights + pack per-block params (trace time, outside the kernel) ----
    flat_params = []
    block_dims = []
    c_prev = C_in
    for p in blocks_params:
        C_mid = p["w_pw"].shape[0]
        C_se = p["w_ser"].shape[0]
        C_out_b = p["w_pwl"].shape[0]
        assert p["w_pw"].shape[1] == c_prev, "channel chain mismatch between blocks"

        w_pw = (p["w_pw"] * p["bn1_s"][:, None]).astype(jnp.float32)        # (C_mid, C_in_b)
        b1 = p["bn1_b"].reshape(C_mid, 1)
        w_dw = p["w_dw"] * p["bn2_s"][:, None]                              # (C_mid, k2)
        b2 = p["bn2_b"].reshape(C_mid, 1)
        b_see = p["b_see"].reshape(C_mid, 1)
        w_ser_t = jnp.transpose(p["w_ser"], (1, 0))                         # (C_mid, C_se)
        w_see = p["w_see"]                                                  # (C_mid, C_se)
        # One packed (C_mid, 3 + k2 + 2*C_se) array for everything living on C_mid sublanes.
        pk_mid = jnp.concatenate([b1, w_dw, b2, b_see, w_ser_t, w_see], axis=1).astype(jnp.float32)
        b_ser = p["b_ser"].reshape(1, C_se).astype(jnp.float32)
        w_pwl = (p["w_pwl"] * p["bn3_s"][:, None]).astype(jnp.float32)      # (C_out_b, C_mid)
        b3 = p["bn3_b"].reshape(C_out_b, 1).astype(jnp.float32)

        flat_params += [w_pw, pk_mid, b_ser, w_pwl, b3]
        block_dims.append((c_prev, C_mid, C_se, C_out_b))
        c_prev = C_out_b
    C_out = c_prev

    # ---- Boundary masks, hoisted out of the kernel: tiny resident (4*pad, HW) f32 input ----
    pos = jnp.arange(HW, dtype=jnp.int32)
    rows_idx = pos // W
    cols_idx = pos % W
    mask_rows = []
    mask_index = {}
    for dh in range(-pad, pad + 1):
        if dh == 0:
            continue
        mask_index[('r', dh)] = len(mask_rows)
        ok = (rows_idx < H - dh) if dh > 0 else (rows_idx >= -dh)
        mask_rows.append(ok.astype(jnp.float32))
    for dw in range(-pad, pad + 1):
        if dw == 0:
            continue
        mask_index[('c', dw)] = len(mask_rows)
        ok = (cols_idx < W - dw) if dw > 0 else (cols_idx >= -dw)
        mask_rows.append(ok.astype(jnp.float32))
    masks = jnp.stack(mask_rows, axis=0)                                    # (4*pad, HW)

    # ---- Images per grid step: pack images, but always keep >= 2 grid steps (2 TCs on v7x) ----
    if N >= 4 and N % 2 == 0:
        B = N // 2
    else:
        B = 1
    grid = (N // B,)

    # NCHW -> (N, C, HW): pure reshape, no transpose (kernel-native layout).
    x = x_nchw.reshape(N, C_in, HW).astype(jnp.float32)

    def resident(a):
        nd = a.ndim
        return pl.BlockSpec(a.shape, lambda i, _nd=nd: (0,) * _nd)

    kernel = _make_fused_kernel(H, W, ksize, block_dims, mask_index, B)

    out = pl.pallas_call(
        kernel,
        out_shape=jax.ShapeDtypeStruct((N, C_out, HW), jnp.float32),
        grid=grid,
        in_specs=[resident(masks),
                  pl.BlockSpec((B, C_in, HW), lambda i: (i, 0, 0))]
                 + [resident(a) for a in flat_params],
        out_specs=pl.BlockSpec((B, C_out, HW), lambda i: (i, 0, 0)),
        compiler_params=pltpu.CompilerParams(dimension_semantics=("parallel",)),
    )(masks, x, *flat_params)

    return out.reshape(N, C_out, H, W)


# --------------------------------------------------------------------------------------
# Deterministic synthetic parameter init (PyTorch-analogue layouts, BN pre-folded to scale/bias).
# --------------------------------------------------------------------------------------
def init_inverted_residual_params(key, C_in, C_out, ksize=3, exp_ratio=6.0, se_ratio=0.25, eps=1e-5):
    C_mid = int(round(C_in * exp_ratio))
    C_se = max(1, int(C_in * se_ratio))
    keys = jax.random.split(key, 20)

    def folded_bn(k0, k1, k2, k3, C):
        gamma = jax.random.uniform(k0, (C,), jnp.float32, 0.5, 1.5)
        beta = 0.1 * jax.random.normal(k1, (C,), jnp.float32)
        mean = 0.1 * jax.random.normal(k2, (C,), jnp.float32)
        var = jax.random.uniform(k3, (C,), jnp.float32, 0.5, 1.5)
        scale = gamma / jnp.sqrt(var + eps)
        bias = beta - mean * scale
        return scale, bias

    p = {}
    p["w_pw"] = jax.random.normal(keys[0], (C_mid, C_in), jnp.float32) / jnp.sqrt(C_in)
    p["bn1_s"], p["bn1_b"] = folded_bn(keys[1], keys[2], keys[3], keys[4], C_mid)
    p["w_dw"] = jax.random.normal(keys[5], (C_mid, ksize * ksize), jnp.float32) / ksize
    p["bn2_s"], p["bn2_b"] = folded_bn(keys[6], keys[7], keys[8], keys[9], C_mid)
    p["w_ser"] = jax.random.normal(keys[10], (C_se, C_mid), jnp.float32) / jnp.sqrt(C_mid)
    p["b_ser"] = 0.05 * jax.random.normal(keys[11], (C_se,), jnp.float32)
    p["w_see"] = jax.random.normal(keys[12], (C_mid, C_se), jnp.float32) / jnp.sqrt(C_se)
    p["b_see"] = 0.05 * jax.random.normal(keys[13], (C_mid,), jnp.float32)
    p["w_pwl"] = jax.random.normal(keys[14], (C_out, C_mid), jnp.float32) / jnp.sqrt(C_mid)
    p["bn3_s"], p["bn3_b"] = folded_bn(keys[15], keys[16], keys[17], keys[18], C_out)
    return p


# --------------------------------------------------------------------------------------
# Pure-JAX reference (NCHW), HIGHEST matmul precision so the f32 kernel can be checked at ~1e-5.
# --------------------------------------------------------------------------------------
def inverted_residual_ref(x, p, ksize=3):
    HP = jax.lax.Precision.HIGHEST
    N, C_in, H, W = x.shape
    pad = ksize // 2
    C_out = p["w_pwl"].shape[0]
    x = x.astype(jnp.float32)

    h = jnp.einsum("mc,nchw->nmhw", p["w_pw"], x, precision=HP)
    h = h * p["bn1_s"][None, :, None, None] + p["bn1_b"][None, :, None, None]
    h = h * jax.nn.sigmoid(h)

    hp = jnp.pad(h, ((0, 0), (0, 0), (pad, pad), (pad, pad)))
    acc = jnp.zeros_like(h)
    for di in range(ksize):
        for dj in range(ksize):
            tap = p["w_dw"][:, di * ksize + dj]
            acc = acc + hp[:, :, di:di + H, dj:dj + W] * tap[None, :, None, None]
    d = acc * p["bn2_s"][None, :, None, None] + p["bn2_b"][None, :, None, None]
    d = d * jax.nn.sigmoid(d)

    se = jnp.mean(d, axis=(2, 3), keepdims=True)
    se_r = jnp.einsum("sc,ncij->nsij", p["w_ser"], se, precision=HP) + p["b_ser"][None, :, None, None]
    se_r = se_r * jax.nn.sigmoid(se_r)
    se_e = jnp.einsum("cs,nsij->ncij", p["w_see"], se_r, precision=HP) + p["b_see"][None, :, None, None]
    d = d * jax.nn.sigmoid(se_e)

    out = jnp.einsum("oc,nchw->nohw", p["w_pwl"], d, precision=HP)
    out = out * p["bn3_s"][None, :, None, None] + p["bn3_b"][None, :, None, None]
    if C_in == C_out:
        out = out + x
    return out


def efficientnet_block_ref(x, blocks_params, ksize=3):
    for p in blocks_params:
        x = inverted_residual_ref(x, p, ksize=ksize)
    return x


if __name__ == "__main__":
    key = jax.random.PRNGKey(0)
    kx, kp1, kp2 = jax.random.split(key, 3)

    N, C_in, H, W = 2, 8, 16, 16
    ksize = 3
    x = jax.random.normal(kx, (N, C_in, H, W), jnp.float32)

    # Config A: EfficientNetBlock(8, 8, num_blocks=1, kernel_size=3)  -> single residual MBConv.
    params_a = [init_inverted_residual_params(kp1, C_in, 8, ksize)]
    y_a = jax.block_until_ready(efficientnet_block_pallas(x, params_a, ksize=ksize))
    y_a_ref = jax.block_until_ready(efficientnet_block_ref(x, params_a, ksize=ksize))
    assert y_a.shape == (N, 8, H, W)
    assert jnp.allclose(y_a, y_a_ref, rtol=2e-5, atol=2e-5), "config A mismatch vs reference"

    # Config B: EfficientNetBlock(8, 16, num_blocks=2, kernel_size=3) -> two fused blocks (8->8->16).
    kb0, kb1 = jax.random.split(kp2)
    params_b = [init_inverted_residual_params(kb0, C_in, C_in, ksize),
                init_inverted_residual_params(kb1, C_in, 16, ksize)]
    y_b = jax.block_until_ready(efficientnet_block_pallas(x, params_b, ksize=ksize))
    y_b_ref = jax.block_until_ready(efficientnet_block_ref(x, params_b, ksize=ksize))
    assert y_b.shape == (N, 16, H, W)
    assert jnp.allclose(y_b, y_b_ref, rtol=2e-5, atol=2e-5), "config B mismatch vs reference"

    print("KERNEL_OK")
</pallas_src>

<mosaic_0001>
module attributes {stable_mosaic.version = 11 : i64} {
  func.func @kernel(%arg0: i32, %arg1: memref<4x256xf32, #tpu.memory_space<vmem>>, %arg2: memref<1x8x256xf32, #tpu.memory_space<vmem>>, %arg3: memref<48x8xf32, #tpu.memory_space<vmem>>, %arg4: memref<48x16xf32, #tpu.memory_space<vmem>>, %arg5: memref<1x2xf32, #tpu.memory_space<vmem>>, %arg6: memref<8x48xf32, #tpu.memory_space<vmem>>, %arg7: memref<8x1xf32, #tpu.memory_space<vmem>>, %arg8: memref<1x8x256xf32, #tpu.memory_space<vmem>>) attributes {dimension_semantics = [#tpu.dimension_semantics<parallel>], iteration_bounds = array<i64: 2>, scalar_prefetch = 0 : i64, scratch_operands = 0 : i64, tpu.core_type = #tpu.core_type<tc>, window_params = [{pipeline_mode = #tpu.pipeline_mode<synchronous>, transform_indices = @transform_0, window_bounds = array<i64: 4, 256>}, {transform_indices = @transform_1, window_bounds = array<i64: 1, 8, 256>}, {pipeline_mode = #tpu.pipeline_mode<synchronous>, transform_indices = @transform_2, window_bounds = array<i64: 48, 8>}, {pipeline_mode = #tpu.pipeline_mode<synchronous>, transform_indices = @transform_3, window_bounds = array<i64: 48, 16>}, {pipeline_mode = #tpu.pipeline_mode<synchronous>, transform_indices = @transform_4, window_bounds = array<i64: 1, 2>}, {pipeline_mode = #tpu.pipeline_mode<synchronous>, transform_indices = @transform_5, window_bounds = array<i64: 8, 48>}, {pipeline_mode = #tpu.pipeline_mode<synchronous>, transform_indices = @transform_6, window_bounds = array<i64: 8, 1>}, {transform_indices = @transform_7, window_bounds = array<i64: 1, 8, 256>}]} {
    %c0 = arith.constant 0 : index
    %c0_0 = arith.constant 0 : index
    %0 = vector.load %arg1[%c0, %c0_0] : memref<4x256xf32, #tpu.memory_space<vmem>>, vector<4x256xf32>
    %c0_1 = arith.constant 0 : index
    %c0_2 = arith.constant 0 : index
    %1 = vector.load %arg4[%c0_1, %c0_2] : memref<48x16xf32, #tpu.memory_space<vmem>>, vector<48x16xf32>
    %c0_3 = arith.constant 0 : index
    %c0_4 = arith.constant 0 : index
    %2 = vector.load %arg3[%c0_3, %c0_4] : memref<48x8xf32, #tpu.memory_space<vmem>>, vector<48x8xf32>
    %3 = vector.extract_strided_slice %1 {offsets = [0, 0], sizes = [48, 1], strides = [1, 1]} : vector<48x16xf32> to vector<48x1xf32>
    %4 = vector.extract_strided_slice %1 {offsets = [0, 1], sizes = [48, 9], strides = [1, 1]} : vector<48x16xf32> to vector<48x9xf32>
    %5 = vector.extract_strided_slice %1 {offsets = [0, 10], sizes = [48, 1], strides = [1, 1]} : vector<48x16xf32> to vector<48x1xf32>
    %6 = vector.extract_strided_slice %1 {offsets = [0, 11], sizes = [48, 1], strides = [1, 1]} : vector<48x16xf32> to vector<48x1xf32>
    %7 = vector.extract_strided_slice %1 {offsets = [0, 12], sizes = [48, 2], strides = [1, 1]} : vector<48x16xf32> to vector<48x2xf32>
    %8 = vector.extract_strided_slice %1 {offsets = [0, 14], sizes = [48, 2], strides = [1, 1]} : vector<48x16xf32> to vector<48x2xf32>
    %c0_5 = arith.constant 0 : index
    %c0_6 = arith.constant 0 : index
    %9 = vector.load %arg5[%c0_5, %c0_6] : memref<1x2xf32, #tpu.memory_space<vmem>>, vector<1x2xf32>
    %c0_7 = arith.constant 0 : index
    %c0_8 = arith.constant 0 : index
    %10 = vector.load %arg6[%c0_7, %c0_8] : memref<8x48xf32, #tpu.memory_space<vmem>>, vector<8x48xf32>
    %c0_9 = arith.constant 0 : index
    %c0_10 = arith.constant 0 : index
    %11 = vector.load %arg7[%c0_9, %c0_10] : memref<8x1xf32, #tpu.memory_space<vmem>>, vector<8x1xf32>
    %c0_11 = arith.constant 0 : index
    %c0_12 = arith.constant 0 : index
    %c0_13 = arith.constant 0 : index
    %12 = vector.load %arg2[%c0_11, %c0_12, %c0_13] : memref<1x8x256xf32, #tpu.memory_space<vmem>>, vector<1x8x256xf32>
    %13 = vector.shape_cast %12 : vector<1x8x256xf32> to vector<8x256xf32>
    %cst = arith.constant dense<0.000000e+00> : vector<48x256xf32>
    %14 = tpu.matmul %2, %13, %cst {dimension_numbers = #tpu.dot_dimension_numbers<[1], [0], [0], [1], [0, 0, 1, 1], [], []>} : vector<48x8xf32>, vector<8x256xf32>, vector<48x256xf32> -> vector<48x256xf32>
    %15 = vector.broadcast %3 : vector<48x1xf32> to vector<48x256xf32>
    %16 = arith.addf %14, %15 : vector<48x256xf32>
    %17 = arith.negf %16 : vector<48x256xf32>
    %18 = math.exp %17 : vector<48x256xf32>
    %cst_14 = arith.constant 1.000000e+00 : f32
    %19 = vector.broadcast %cst_14 : f32 to vector<48x256xf32>
    %20 = arith.addf %19, %18 : vector<48x256xf32>
    %21 = arith.divf %19, %20 : vector<48x256xf32>
    %22 = arith.mulf %16, %21 : vector<48x256xf32>
    %cst_15 = arith.constant 0.000000e+00 : f32
    %23 = vector.broadcast %cst_15 : f32 to vector<48x256xf32>
    %c16_i32 = arith.constant 16 : i32
    %24 = tpu.dynamic_rotate %22 by %c16_i32 dim 1 : vector<48x256xf32>, i32 -> vector<48x256xf32>
    %25 = vector.extract_strided_slice %0 {offsets = [0, 0], sizes = [1, 256], strides = [1, 1]} : vector<4x256xf32> to vector<1x256xf32>
    %26 = vector.broadcast %25 : vector<1x256xf32> to vector<48x256xf32>
    %27 = arith.mulf %24, %26 : vector<48x256xf32>
    %c1_i32 = arith.constant 1 : i32
    %28 = tpu.dynamic_rotate %27 by %c1_i32 dim 1 : vector<48x256xf32>, i32 -> vector<48x256xf32>
    %29 = vector.extract_strided_slice %0 {offsets = [2, 0], sizes = [1, 256], strides = [1, 1]} : vector<4x256xf32> to vector<1x256xf32>
    %30 = vector.broadcast %29 : vector<1x256xf32> to vector<48x256xf32>
    %31 = arith.mulf %28, %30 : vector<48x256xf32>
    %32 = vector.extract_strided_slice %4 {offsets = [0, 0], sizes = [48, 1], strides = [1, 1]} : vector<48x9xf32> to vector<48x1xf32>
    %33 = vector.broadcast %32 : vector<48x1xf32> to vector<48x256xf32>
    %34 = arith.mulf %31, %33 : vector<48x256xf32>
    %35 = arith.addf %23, %34 : vector<48x256xf32>
    %36 = vector.extract_strided_slice %4 {offsets = [0, 1], sizes = [48, 1], strides = [1, 1]} : vector<48x9xf32> to vector<48x1xf32>
    %37 = vector.broadcast %36 : vector<48x1xf32> to vector<48x256xf32>
    %38 = arith.mulf %27, %37 : vector<48x256xf32>
    %39 = arith.addf %35, %38 : vector<48x256xf32>
    %c255_i32 = arith.constant 255 : i32
    %40 = tpu.dynamic_rotate %27 by %c255_i32 dim 1 : vector<48x256xf32>, i32 -> vector<48x256xf32>
    %41 = vector.extract_strided_slice %0 {offsets = [3, 0], sizes = [1, 256], strides = [1, 1]} : vector<4x256xf32> to vector<1x256xf32>
    %42 = vector.broadcast %41 : vector<1x256xf32> to vector<48x256xf32>
    %43 = arith.mulf %40, %42 : vector<48x256xf32>
    %44 = vector.extract_strided_slice %4 {offsets = [0, 2], sizes = [48, 1], strides = [1, 1]} : vector<48x9xf32> to vector<48x1xf32>
    %45 = vector.broadcast %44 : vector<48x1xf32> to vector<48x256xf32>
    %46 = arith.mulf %43, %45 : vector<48x256xf32>
    %47 = arith.addf %39, %46 : vector<48x256xf32>
    %c1_i32_16 = arith.constant 1 : i32
    %48 = tpu.dynamic_rotate %22 by %c1_i32_16 dim 1 : vector<48x256xf32>, i32 -> vector<48x256xf32>
    %49 = vector.extract_strided_slice %0 {offsets = [2, 0], sizes = [1, 256], strides = [1, 1]} : vector<4x256xf32> to vector<1x256xf32>
    %50 = vector.broadcast %49 : vector<1x256xf32> to vector<48x256xf32>
    %51 = arith.mulf %48, %50 : vector<48x256xf32>
    %52 = vector.extract_strided_slice %4 {offsets = [0, 3], sizes = [48, 1], strides = [1, 1]} : vector<48x9xf32> to vector<48x1xf32>
    %53 = vector.broadcast %52 : vector<48x1xf32> to vector<48x256xf32>
    %54 = arith.mulf %51, %53 : vector<48x256xf32>
    %55 = arith.addf %47, %54 : vector<48x256xf32>
    %56 = vector.extract_strided_slice %4 {offsets = [0, 4], sizes = [48, 1], strides = [1, 1]} : vector<48x9xf32> to vector<48x1xf32>
    %57 = vector.broadcast %56 : vector<48x1xf32> to vector<48x256xf32>
    %58 = arith.mulf %22, %57 : vector<48x256xf32>
    %59 = arith.addf %55, %58 : vector<48x256xf32>
    %c255_i32_17 = arith.constant 255 : i32
    %60 = tpu.dynamic_rotate %22 by %c255_i32_17 dim 1 : vector<48x256xf32>, i32 -> vector<48x256xf32>
    %61 = vector.extract_strided_slice %0 {offsets = [3, 0], sizes = [1, 256], strides = [1, 1]} : vector<4x256xf32> to vector<1x256xf32>
    %62 = vector.broadcast %61 : vector<1x256xf32> to vector<48x256xf32>
    %63 = arith.mulf %60, %62 : vector<48x256xf32>
    %64 = vector.extract_strided_slice %4 {offsets = [0, 5], sizes = [48, 1], strides = [1, 1]} : vector<48x9xf32> to vector<48x1xf32>
    %65 = vector.broadcast %64 : vector<48x1xf32> to vector<48x256xf32>
    %66 = arith.mulf %63, %65 : vector<48x256xf32>
    %67 = arith.addf %59, %66 : vector<48x256xf32>
    %c240_i32 = arith.constant 240 : i32
    %68 = tpu.dynamic_rotate %22 by %c240_i32 dim 1 : vector<48x256xf32>, i32 -> vector<48x256xf32>
    %69 = vector.extract_strided_slice %0 {offsets = [1, 0], sizes = [1, 256], strides = [1, 1]} : vector<4x256xf32> to vector<1x256xf32>
    %70 = vector.broadcast %69 : vector<1x256xf32> to vector<48x256xf32>
    %71 = arith.mulf %68, %70 : vector<48x256xf32>
    %c1_i32_18 = arith.constant 1 : i32
    %72 = tpu.dynamic_rotate %71 by %c1_i32_18 dim 1 : vector<48x256xf32>, i32 -> vector<48x256xf32>
    %73 = vector.extract_strided_slice %0 {offsets = [2, 0], sizes = [1, 256], strides = [1, 1]} : vector<4x256xf32> to vector<1x256xf32>
    %74 = vector.broadcast %73 : vector<1x256xf32> to vector<48x256xf32>
    %75 = arith.mulf %72, %74 : vector<48x256xf32>
    %76 = vector.extract_strided_slice %4 {offsets = [0, 6], sizes = [48, 1], strides = [1, 1]} : vector<48x9xf32> to vector<48x1xf32>
    %77 = vector.broadcast %76 : vector<48x1xf32> to vector<48x256xf32>
    %78 = arith.mulf %75, %77 : vector<48x256xf32>
    %79 = arith.addf %67, %78 : vector<48x256xf32>
    %80 = vector.extract_strided_slice %4 {offsets = [0, 7], sizes = [48, 1], strides = [1, 1]} : vector<48x9xf32> to vector<48x1xf32>
    %81 = vector.broadcast %80 : vector<48x1xf32> to vector<48x256xf32>
    %82 = arith.mulf %71, %81 : vector<48x256xf32>
    %83 = arith.addf %79, %82 : vector<48x256xf32>
    %c255_i32_19 = arith.constant 255 : i32
    %84 = tpu.dynamic_rotate %71 by %c255_i32_19 dim 1 : vector<48x256xf32>, i32 -> vector<48x256xf32>
    %85 = vector.extract_strided_slice %0 {offsets = [3, 0], sizes = [1, 256], strides = [1, 1]} : vector<4x256xf32> to vector<1x256xf32>
    %86 = vector.broadcast %85 : vector<1x256xf32> to vector<48x256xf32>
    %87 = arith.mulf %84, %86 : vector<48x256xf32>
    %88 = vector.extract_strided_slice %4 {offsets = [0, 8], sizes = [48, 1], strides = [1, 1]} : vector<48x9xf32> to vector<48x1xf32>
    %89 = vector.broadcast %88 : vector<48x1xf32> to vector<48x256xf32>
    %90 = arith.mulf %87, %89 : vector<48x256xf32>
    %91 = arith.addf %83, %90 : vector<48x256xf32>
    %92 = vector.broadcast %5 : vector<48x1xf32> to vector<48x256xf32>
    %93 = arith.addf %91, %92 : vector<48x256xf32>
    %94 = arith.negf %93 : vector<48x256xf32>
    %95 = math.exp %94 : vector<48x256xf32>
    %cst_20 = arith.constant 1.000000e+00 : f32
    %96 = vector.broadcast %cst_20 : f32 to vector<48x256xf32>
    %97 = arith.addf %96, %95 : vector<48x256xf32>
    %98 = arith.divf %96, %97 : vector<48x256xf32>
    %99 = arith.mulf %93, %98 : vector<48x256xf32>
    %cst_21 = arith.constant dense<0.000000e+00> : vector<48xf32>
    %100 = vector.multi_reduction <add>, %99, %cst_21 [1] : vector<48x256xf32> to vector<48xf32>
    %101 = vector.shape_cast %100 : vector<48xf32> to vector<48x1xf32>
    %cst_22 = arith.constant 2.560000e+02 : f32
    %102 = vector.broadcast %cst_22 : f32 to vector<48x1xf32>
    %103 = arith.divf %101, %102 : vector<48x1xf32>
    %104 = vector.broadcast %103 : vector<48x1xf32> to vector<48x2xf32>
    %105 = arith.mulf %7, %104 : vector<48x2xf32>
    %cst_23 = arith.constant dense<0.000000e+00> : vector<2xf32>
    %106 = vector.multi_reduction <add>, %105, %cst_23 [0] : vector<48x2xf32> to vector<2xf32>
    %107 = vector.shape_cast %106 : vector<2xf32> to vector<1x2xf32>
    %108 = arith.addf %107, %9 : vector<1x2xf32>
    %109 = arith.negf %108 : vector<1x2xf32>
    %110 = math.exp %109 : vector<1x2xf32>
    %cst_24 = arith.constant 1.000000e+00 : f32
    %111 = vector.broadcast %cst_24 : f32 to vector<1x2xf32>
    %112 = arith.addf %111, %110 : vector<1x2xf32>
    %113 = arith.divf %111, %112 : vector<1x2xf32>
    %114 = arith.mulf %108, %113 : vector<1x2xf32>
    %115 = vector.broadcast %114 : vector<1x2xf32> to vector<48x2xf32>
    %116 = arith.mulf %8, %115 : vector<48x2xf32>
    %cst_25 = arith.constant dense<0.000000e+00> : vector<48xf32>
    %117 = vector.multi_reduction <add>, %116, %cst_25 [1] : vector<48x2xf32> to vector<48xf32>
    %118 = vector.shape_cast %117 : vector<48xf32> to vector<48x1xf32>
    %119 = arith.addf %118, %6 : vector<48x1xf32>
    %120 = arith.negf %119 : vector<48x1xf32>
    %121 = math.exp %120 : vector<48x1xf32>
    %cst_26 = arith.constant 1.000000e+00 : f32
    %122 = vector.broadcast %cst_26 : f32 to vector<48x1xf32>
    %123 = arith.addf %122, %121 : vector<48x1xf32>
    %124 = arith.divf %122, %123 : vector<48x1xf32>
    %125 = vector.broadcast %124 : vector<48x1xf32> to vector<48x256xf32>
    %126 = arith.mulf %99, %125 : vector<48x256xf32>
    %cst_27 = arith.constant dense<0.000000e+00> : vector<8x256xf32>
    %127 = tpu.matmul %10, %126, %cst_27 {dimension_numbers = #tpu.dot_dimension_numbers<[1], [0], [0], [1], [0, 0, 1, 1], [], []>} : vector<8x48xf32>, vector<48x256xf32>, vector<8x256xf32> -> vector<8x256xf32>
    %128 = vector.broadcast %11 : vector<8x1xf32> to vector<8x256xf32>
    %129 = arith.addf %127, %128 : vector<8x256xf32>
    %130 = arith.addf %129, %13 : vector<8x256xf32>
    %c0_28 = arith.constant 0 : index
    %c0_29 = arith.constant 0 : index
    %c0_30 = arith.constant 0 : index
    %131 = vector.load %arg8[%c0_28, %c0_29, %c0_30] : memref<1x8x256xf32, #tpu.memory_space<vmem>>, vector<1x8x256xf32>
    %132 = vector.shape_cast %131 : vector<1x8x256xf32> to vector<8x256xf32>
    %133 = vector.shape_cast %130 : vector<8x256xf32> to vector<1x8x256xf32>
    tpu.vector_store %arg8[%c0_28, %c0_29, %c0_30], %133 {strides = array<i32>} : memref<1x8x256xf32, #tpu.memory_space<vmem>>, vector<1x8x256xf32>,
    return
  }
  func.func @transform_0(%arg0: i32) -> (i32, i32) {
    %c0_i32 = arith.constant 0 : i32
    %c0_i32_0 = arith.constant 0 : i32
    %c0_i32_1 = arith.constant 0 : i32
    return %c0_i32, %c0_i32_0 : i32, i32
  }
  func.func @transform_1(%arg0: i32) -> (i32, i32, i32) {
    %c0_i32 = arith.constant 0 : i32
    %c0_i32_0 = arith.constant 0 : i32
    %c0_i32_1 = arith.constant 0 : i32
    return %arg0, %c0_i32, %c0_i32_0 : i32, i32, i32
  }
  func.func @transform_2(%arg0: i32) -> (i32, i32) {
    %c0_i32 = arith.constant 0 : i32
    %c0_i32_0 = arith.constant 0 : i32
    %c0_i32_1 = arith.constant 0 : i32
    return %c0_i32, %c0_i32_0 : i32, i32
  }
  func.func @transform_3(%arg0: i32) -> (i32, i32) {
    %c0_i32 = arith.constant 0 : i32
    %c0_i32_0 = arith.constant 0 : i32
    %c0_i32_1 = arith.constant 0 : i32
    return %c0_i32, %c0_i32_0 : i32, i32
  }
  func.func @transform_4(%arg0: i32) -> (i32, i32) {
    %c0_i32 = arith.constant 0 : i32
    %c0_i32_0 = arith.constant 0 : i32
    %c0_i32_1 = arith.constant 0 : i32
    return %c0_i32, %c0_i32_0 : i32, i32
  }
  func.func @transform_5(%arg0: i32) -> (i32, i32) {
    %c0_i32 = arith.constant 0 : i32
    %c0_i32_0 = arith.constant 0 : i32
    %c0_i32_1 = arith.constant 0 : i32
    return %c0_i32, %c0_i32_0 : i32, i32
  }
  func.func @transform_6(%arg0: i32) -> (i32, i32) {
    %c0_i32 = arith.constant 0 : i32
    %c0_i32_0 = arith.constant 0 : i32
    %c0_i32_1 = arith.constant 0 : i32
    return %c0_i32, %c0_i32_0 : i32, i32
  }
  func.func @transform_7(%arg0: i32) -> (i32, i32, i32) {
    %c0_i32 = arith.constant 0 : i32
    %c0_i32_0 = arith.constant 0 : i32
    %c0_i32_1 = arith.constant 0 : i32
    return %arg0, %c0_i32, %c0_i32_0 : i32, i32, i32
  }
}

</mosaic_0001>

<llo_original>
// kernel: tpu_custom_call.1
$region0: #{tpu_custom_call.1}
  #allocation0 [shape = 'u32[]', space=smem, size = 0x4, offset = 0x4, fixed_abs, tag = 'smem constant byte address 0x4 - core index']
  #allocation1 [shape = 'u32[144,128]{1,0:T(1,128)}', space=vmem, size = 0x12000, scoped, tag = 'internal scratch']
  %s0 = inlined_call_operand.vmem [shape: f32[4,256], index: 0, kind: input, shape index: {}]
  %s1 = inlined_call_operand.vmem [shape: f32[2,8,256], index: 1, kind: input, shape index: {}]
  %s2 = inlined_call_operand.vmem [shape: f32[48,8], index: 2, kind: input, shape index: {}]
  %s3 = inlined_call_operand.vmem [shape: f32[48,16], index: 3, kind: input, shape index: {}]
  %s4 = inlined_call_operand.vmem [shape: f32[1,2], index: 4, kind: input, shape index: {}]
  %s5 = inlined_call_operand.vmem [shape: f32[8,48], index: 5, kind: input, shape index: {}]
  %s6 = inlined_call_operand.vmem [shape: f32[8,1], index: 6, kind: input, shape index: {}]
  %s7 = inlined_call_operand.hbm [shape: f32[2,8,256], index: 7, kind: output, shape index: {}]
  %s8 = sld [smem:[#allocation0]]
  $region61: #{tpu_custom_call.1} parent=0
    _
  %s10 = ssub.s32 1, %s8
  %s11 = scalar_select 0, %s10, %s8
  $region1: #{tpu_custom_call.1} parent=0
    #allocation2 [shape = 'u8[16384]{0}', space=vmem, size = 0x4000, scoped, tag = 'output window, operand 0']
    #allocation3 [shape = 's32[2]{0}', space=sflag, size = 0x8, scoped, tag = 'scoped memory for tpu_custom_call.1']
    %12 = vsyncpa [#allocation3], 0
    %s13 = scalar_lea.sflag [#allocation3], 1
    %14 = vsyncpa %s13, 0
    loop: start=0, step=1, limit=4
    $region2: #{tpu_custom_call.1} parent=1 // loop_pre_header
      _
    $region3: #{tpu_custom_call.1} parent=1 // loop_header
      %s16 = sphi 0, %s20
      %p17 = scmp.ge.s32.totalorder %s16, 4
      %s24 = sphi 0, %s24
      %s26 = sphi 0, %s24
      %s27 = sphi 0, %s26
      %s41 = sphi 0, %s27
      %s47 = sphi 0, %s49
      %s50 = sphi 0, %s47
      %s51 = sphi 0, %s50
      %s67 = sphi 0, %s51
      %s71 = sphi 0, %s71
      %s73 = sphi 0, %s71
      %s74 = sphi 0, %s73
      %s88 = sphi 0, %s74
      %s92 = sphi 0, %s92
      %s94 = sphi 0, %s92
      %s95 = sphi 0, %s94
      %s109 = sphi 0, %s95
      %s113 = sphi 0, %s113
      %s115 = sphi 0, %s113
      %s116 = sphi 0, %s115
      %s130 = sphi 0, %s116
      %s134 = sphi 0, %s134
      %s136 = sphi 0, %s134
      %s137 = sphi 0, %s136
      %s151 = sphi 0, %s137
      %s155 = sphi 0, %s155
      %s157 = sphi 0, %s155
      %s158 = sphi 0, %s157
      %s172 = sphi 0, %s158
      %s178 = sphi 0, %s180
      %s181 = sphi 0, %s178
      %s182 = sphi 0, %s181
      %s198 = sphi 0, %s182
    $region4: #{tpu_custom_call.1} parent=1 // loop_header_branch
      %19 = sbr.rel (%p17) target = $region8
    $region5: #{tpu_custom_call.1} parent=1 // loop_body
      %s21 = ssub.s32 %s16, 1
      %s22 = ssub.s32 %s16, 2
      %s23 = sadd.s32 %s16, 1
      %s25 = sadd.s32 %s24, 1
      %p28 = scmp.eq.s32.totalorder %s16, 1
      %p29 = scmp.ne.s32.totalorder %s24, %s26
      %p30 = scmp.eq.s32.totalorder %s16, 0
      %p31 = por %p29, %p30
      %p32 = scmp.ne.s32.totalorder %s24, %s26
      %p33 = scmp.eq.s32.totalorder %s21, 1
      %p34 = por %p32, %p33
      %p35 = scmp.ne.s32.totalorder %s26, %s27
      %p36 = scmp.eq.s32.totalorder %s21, 0
      %p37 = por %p35, %p36
      %p38 = scmp.ne.s32.totalorder %s26, %s27
      %p39 = scmp.eq.s32.totalorder %s22, 1
      %p40 = por %p38, %p39
      %p42 = scmp.ne.s32.totalorder %s27, %s41
      %p43 = scmp.eq.s32.totalorder %s22, 0
      %p44 = por %p42, %p43
      %s45 = ssub.s32 %s16, %s23
      %p46 = scmp.eq.s32.totalorder %s45, 0
      %s48 = sadd.s32 %s47, 1
      %s49 = scalar_select %p46, %s47, %s48
      %p52 = pneg %p46
      %p53 = scmp.eq.s32.totalorder %s16, 1
      %p54 = por %p52, %p53
      %p55 = scmp.ne.s32.totalorder %s47, %s50
      %p56 = scmp.eq.s32.totalorder %s16, 0
      %p57 = por %p55, %p56
      %p58 = scmp.ne.s32.totalorder %s47, %s50
      %p59 = scmp.eq.s32.totalorder %s21, 1
      %p60 = por %p58, %p59
      %p61 = scmp.ne.s32.totalorder %s50, %s51
      %p62 = scmp.eq.s32.totalorder %s21, 0
      %p63 = por %p61, %p62
      %p64 = scmp.ne.s32.totalorder %s50, %s51
      %p65 = scmp.eq.s32.totalorder %s22, 1
      %p66 = por %p64, %p65
      %p68 = scmp.ne.s32.totalorder %s51, %s67
      %p69 = scmp.eq.s32.totalorder %s22, 0
      %p70 = por %p68, %p69
      %s72 = sadd.s32 %s71, 1
      %p75 = scmp.eq.s32.totalorder %s16, 1
      %p76 = scmp.ne.s32.totalorder %s71, %s73
      %p77 = scmp.eq.s32.totalorder %s16, 0
      %p78 = por %p76, %p77
      %p79 = scmp.ne.s32.totalorder %s71, %s73
      %p80 = scmp.eq.s32.totalorder %s21, 1
      %p81 = por %p79, %p80
      %p82 = scmp.ne.s32.totalorder %s73, %s74
      %p83 = scmp.eq.s32.totalorder %s21, 0
      %p84 = por %p82, %p83
      %p85 = scmp.ne.s32.totalorder %s73, %s74
      %p86 = scmp.eq.s32.totalorder %s22, 1
      %p87 = por %p85, %p86
      %p89 = scmp.ne.s32.totalorder %s74, %s88
      %p90 = scmp.eq.s32.totalorder %s22, 0
      %p91 = por %p89, %p90
      %s93 = sadd.s32 %s92, 1
      %p96 = scmp.eq.s32.totalorder %s16, 1
      %p97 = scmp.ne.s32.totalorder %s92, %s94
      %p98 = scmp.eq.s32.totalorder %s16, 0
      %p99 = por %p97, %p98
      %p100 = scmp.ne.s32.totalorder %s92, %s94
      %p101 = scmp.eq.s32.totalorder %s21, 1
      %p102 = por %p100, %p101
      %p103 = scmp.ne.s32.totalorder %s94, %s95
      %p104 = scmp.eq.s32.totalorder %s21, 0
      %p105 = por %p103, %p104
      %p106 = scmp.ne.s32.totalorder %s94, %s95
      %p107 = scmp.eq.s32.totalorder %s22, 1
      %p108 = por %p106, %p107
      %p110 = scmp.ne.s32.totalorder %s95, %s109
      %p111 = scmp.eq.s32.totalorder %s22, 0
      %p112 = por %p110, %p111
      %s114 = sadd.s32 %s113, 1
      %p117 = scmp.eq.s32.totalorder %s16, 1
      %p118 = scmp.ne.s32.totalorder %s113, %s115
      %p119 = scmp.eq.s32.totalorder %s16, 0
      %p120 = por %p118, %p119
      %p121 = scmp.ne.s32.totalorder %s113, %s115
      %p122 = scmp.eq.s32.totalorder %s21, 1
      %p123 = por %p121, %p122
      %p124 = scmp.ne.s32.totalorder %s115, %s116
      %p125 = scmp.eq.s32.totalorder %s21, 0
      %p126 = por %p124, %p125
      %p127 = scmp.ne.s32.totalorder %s115, %s116
      %p128 = scmp.eq.s32.totalorder %s22, 1
      %p129 = por %p127, %p128
      %p131 = scmp.ne.s32.totalorder %s116, %s130
      %p132 = scmp.eq.s32.totalorder %s22, 0
      %p133 = por %p131, %p132
      %s135 = sadd.s32 %s134, 1
      %p138 = scmp.eq.s32.totalorder %s16, 1
      %p139 = scmp.ne.s32.totalorder %s134, %s136
      %p140 = scmp.eq.s32.totalorder %s16, 0
      %p141 = por %p139, %p140
      %p142 = scmp.ne.s32.totalorder %s134, %s136
      %p143 = scmp.eq.s32.totalorder %s21, 1
      %p144 = por %p142, %p143
      %p145 = scmp.ne.s32.totalorder %s136, %s137
      %p146 = scmp.eq.s32.totalorder %s21, 0
      %p147 = por %p145, %p146
      %p148 = scmp.ne.s32.totalorder %s136, %s137
      %p149 = scmp.eq.s32.totalorder %s22, 1
      %p150 = por %p148, %p149
      %p152 = scmp.ne.s32.totalorder %s137, %s151
      %p153 = scmp.eq.s32.totalorder %s22, 0
      %p154 = por %p152, %p153
      %s156 = sadd.s32 %s155, 1
      %p159 = scmp.eq.s32.totalorder %s16, 1
      %p160 = scmp.ne.s32.totalorder %s155, %s157
      %p161 = scmp.eq.s32.totalorder %s16, 0
      %p162 = por %p160, %p161
      %p163 = scmp.ne.s32.totalorder %s155, %s157
      %p164 = scmp.eq.s32.totalorder %s21, 1
      %p165 = por %p163, %p164
      %p166 = scmp.ne.s32.totalorder %s157, %s158
      %p167 = scmp.eq.s32.totalorder %s21, 0
      %p168 = por %p166, %p167
      %p169 = scmp.ne.s32.totalorder %s157, %s158
      %p170 = scmp.eq.s32.totalorder %s22, 1
      %p171 = por %p169, %p170
      %p173 = scmp.ne.s32.totalorder %s158, %s172
      %p174 = scmp.eq.s32.totalorder %s22, 0
      %p175 = por %p173, %p174
      %s176 = ssub.s32 %s16, %s23
      %p177 = scmp.eq.s32.totalorder %s176, 0
      %s179 = sadd.s32 %s178, 1
      %s180 = scalar_select %p177, %s178, %s179
      %p183 = pneg %p177
      %p184 = scmp.eq.s32.totalorder %s16, 1
      %p185 = por %p183, %p184
      %p186 = scmp.ne.s32.totalorder %s178, %s181
      %p187 = scmp.eq.s32.totalorder %s16, 0
      %p188 = por %p186, %p187
      %p189 = scmp.ne.s32.totalorder %s178, %s181
      %p190 = scmp.eq.s32.totalorder %s21, 1
      %p191 = por %p189, %p190
      %p192 = scmp.ne.s32.totalorder %s181, %s182
      %p193 = scmp.eq.s32.totalorder %s21, 0
      %p194 = por %p192, %p193
      %p195 = scmp.ne.s32.totalorder %s181, %s182
      %p196 = scmp.eq.s32.totalorder %s22, 1
      %p197 = por %p195, %p196
      %p199 = scmp.ne.s32.totalorder %s182, %s198
      %p200 = scmp.eq.s32.totalorder %s22, 0
      %p201 = por %p199, %p200
      %p202 = scmp.le.s32.totalorder 1, %s16
      %p203 = scmp.lt.s32.totalorder %s16, 3
      %p204 = pnand %p202, %p203
      %p205 = pneg %p204
      // Predicated region
      $region9: #{tpu_custom_call.1} parent=5 // pred_check
        _
      $region10: #{tpu_custom_call.1} parent=5 // pred_check_branch
        %207 = sbr.rel (%p204) target = $region12
      $region11: #{tpu_custom_call.1} parent=5 // pred_region
        %s208 = ssub.s32 %s16, 1
        // Predicated region
        $region13: #{tpu_custom_call.1} parent=11 // pred_check
          %p209 = pneg %p37
        $region14: #{tpu_custom_call.1} parent=11 // pred_check_branch
          %211 = sbr.rel (%p209) target = $region16
        $region15: #{tpu_custom_call.1} parent=11 // pred_region
          _
        $region16: #{tpu_custom_call.1} parent=11 // pred_fallthru
          _
        // Predicated region
        $region17: #{tpu_custom_call.1} parent=11 // pred_check
          %p212 = pneg %p84
        $region18: #{tpu_custom_call.1} parent=11 // pred_check_branch
          %214 = sbr.rel (%p212) target = $region20
        $region19: #{tpu_custom_call.1} parent=11 // pred_region
          _
        $region20: #{tpu_custom_call.1} parent=11 // pred_fallthru
          _
        // Predicated region
        $region21: #{tpu_custom_call.1} parent=11 // pred_check
          %p215 = pneg %p105
        $region22: #{tpu_custom_call.1} parent=11 // pred_check_branch
          %217 = sbr.rel (%p215) target = $region24
        $region23: #{tpu_custom_call.1} parent=11 // pred_region
          _
        $region24: #{tpu_custom_call.1} parent=11 // pred_fallthru
          _
        // Predicated region
        $region25: #{tpu_custom_call.1} parent=11 // pred_check
          %p218 = pneg %p126
        $region26: #{tpu_custom_call.1} parent=11 // pred_check_branch
          %220 = sbr.rel (%p218) target = $region28
        $region27: #{tpu_custom_call.1} parent=11 // pred_region
          _
        $region28: #{tpu_custom_call.1} parent=11 // pred_fallthru
          _
        // Predicated region
        $region29: #{tpu_custom_call.1} parent=11 // pred_check
          %p221 = pneg %p147
        $region30: #{tpu_custom_call.1} parent=11 // pred_check_branch
          %223 = sbr.rel (%p221) target = $region32
        $region31: #{tpu_custom_call.1} parent=11 // pred_region
          _
        $region32: #{tpu_custom_call.1} parent=11 // pred_fallthru
          _
        // Predicated region
        $region33: #{tpu_custom_call.1} parent=11 // pred_check
          %p224 = pneg %p168
        $region34: #{tpu_custom_call.1} parent=11 // pred_check_branch
          %226 = sbr.rel (%p224) target = $region36
        $region35: #{tpu_custom_call.1} parent=11 // pred_region
          _
        $region36: #{tpu_custom_call.1} parent=11 // pred_fallthru
          _
      $region12: #{tpu_custom_call.1} parent=5 // pred_fallthru
        _
      %p227 = scmp.lt.s32.totalorder %s16, 2
      // Predicated region
      $region37: #{tpu_custom_call.1} parent=5 // pred_check
        %p228 = pneg %p227
      $region38: #{tpu_custom_call.1} parent=5 // pred_check_branch
        %230 = sbr.rel (%p228) target = $region40
      $region39: #{tpu_custom_call.1} parent=5 // pred_region
        // Predicated region
        $region41: #{tpu_custom_call.1} parent=39 // pred_check
          %p231 = pneg %p57
        $region42: #{tpu_custom_call.1} parent=39 // pred_check_branch
          %233 = sbr.rel (%p231) target = $region44
        $region43: #{tpu_custom_call.1} parent=39 // pred_region
          %p234 = scmp.lt.s32.totalorder %s16, 1
          %s235 = scalar_select %p234, %s16, 1
          %s236 = smul.addr %s235, 2
          %s237 = smul.addr %s236, 8
          %s238 = scalar_lea.vmem %s1, %s237
        $region44: #{tpu_custom_call.1} parent=39 // pred_fallthru
          _
      $region40: #{tpu_custom_call.1} parent=5 // pred_fallthru
        _
      %p239 = scmp.le.s32.totalorder 1, %s16
      %p240 = scmp.lt.s32.totalorder %s16, 3
      %p241 = pnand %p239, %p240
      %p242 = pneg %p241
      // Predicated region
      $region45: #{tpu_custom_call.1} parent=5 // pred_check
        _
      $region46: #{tpu_custom_call.1} parent=5 // pred_check_branch
        %244 = sbr.rel (%p241) target = $region48
      $region47: #{tpu_custom_call.1} parent=5 // pred_region
        %s245 = ssub.s32 %s16, 1
        %p246 = pneg %p37
        %p247 = pneg %p34
        %p248 = scmp.lt.s32.totalorder %s21, 1
        %s249 = scalar_select %p248, %s21, 1
        %s250 = smul.addr %s249, 2
        %s251 = smul.addr %s250, 8
        %s252 = scalar_lea.vmem %s1, %s251
        %p253 = pneg %p63
        %p254 = pneg %p60
        %p255 = pneg %p84
        %p256 = pneg %p81
        %p257 = pneg %p105
        %p258 = pneg %p102
        %p259 = pneg %p126
        %p260 = pneg %p123
        %p261 = pneg %p147
        %p262 = pneg %p144
        %p263 = pneg %p168
        %p264 = pneg %p165
        %p265 = pneg %p194
        %p266 = pneg %p191
        %s267 = sand.u32 %s181, 1
        %s268 = scalar_lea.sflag [#allocation3], %s267
        %s269 = sand.u32 %s181, 1
        %s270 = smul.addr %s269, 16
        %s271 = scalar_lea.vmem [#allocation2], %s270
        %p272 = scmp.lt.s32.totalorder %s21, 1
        %s273 = scalar_select %p272, %s21, 1
        %s274 = smul.addr %s273, 2
        %s275 = smul.addr %s274, 8
        %s276 = scalar_lea.vmem %s1, %s275
        %v277 = vld [vmem:[%s0] sm:$0xff]
        %v278 = vld [vmem:[%s3] sm:$0xff]
        %v279 = vld [vmem:[%s3 + $0x8] sm:$0xff]
        %v280 = vld [vmem:[%s3 + $0x10] sm:$0xff]
        %v281 = vld [vmem:[%s3 + $0x18] sm:$0xff]
        %v282 = vld [vmem:[%s3 + $0x20] sm:$0xff]
        %v283 = vld [vmem:[%s3 + $0x28] sm:$0xff]
        %v284 = vld [vmem:[%s2] sm:$0xff]
        %v285 = vld [vmem:[%s2 + $0x8] sm:$0xff]
        %v286 = vld [vmem:[%s2 + $0x10] sm:$0xff]
        %v287 = vld [vmem:[%s2 + $0x18] sm:$0xff]
        %v288 = vld [vmem:[%s2 + $0x20] sm:$0xff]
        %v289 = vld [vmem:[%s2 + $0x28] sm:$0xff]
        %v290 = vld [vmem:[%s4] sm:$0x1]
        %v291 = vld [vmem:[%s5] sm:$0xff]
        %v292 = vld [vmem:[%s6] sm:$0xff]
        %v293 = vld [vmem:[%s276] sm:$0xff]
        %v294 = vld [vmem:[%s276 + $0x8] sm:$0xff]
        %296 = vset.pattern.permute.xlu0 0
        %297 = vperm.xlu0 %296, %v278
        %v298 = vpop.permute.xlu0 %297
        %301 = vset.pattern.permute.xlu0 0
        %302 = vperm.xlu0 %301, %v279
        %v303 = vpop.permute.xlu0 %302
        %306 = vset.pattern.permute.xlu0 0
        %307 = vperm.xlu0 %306, %v280
        %v308 = vpop.permute.xlu0 %307
        %311 = vset.pattern.permute.xlu0 0
        %312 = vperm.xlu0 %311, %v281
        %v313 = vpop.permute.xlu0 %312
        %316 = vset.pattern.permute.xlu0 0
        %317 = vperm.xlu0 %316, %v282
        %v318 = vpop.permute.xlu0 %317
        %321 = vset.pattern.permute.xlu0 0
        %322 = vperm.xlu0 %321, %v283
        %v323 = vpop.permute.xlu0 %322
        %vm325 = vcmask 64512
        %v327 = vsel %vm325, %v284, 0
        %v330 = vsel %vm325, %v285, 0
        %v333 = vsel %vm325, %v286, 0
        %v336 = vsel %vm325, %v287, 0
        %v339 = vsel %vm325, %v288, 0
        %v342 = vsel %vm325, %v289, 0
        %344 = vmatprep.subr.mxu0 0.0
        %345 = vmatpush1.msra.mxu0 0.0
        %346 = vmatprep.subr.mxu0 0.0
        %347 = vmatpush1.msra.mxu0 0.0
        %348 = vmatprep.subr.mxu0 0.0
        %349 = vmatpush1.msra.mxu0 0.0
        %350 = vmatprep.subr.mxu0 0.0
        %351 = vmatpush1.msra.mxu0 0.0
        %352 = vmatprep.subr.mxu0 0.0
        %353 = vmatpush1.msra.mxu0 0.0
        %354 = vmatprep.subr.mxu0 0.0
        %355 = vmatpush1.msra.mxu0 0.0
        %356 = vmatprep.subr.mxu0 0.0
        %357 = vmatpush1.msra.mxu0 0.0
        %358 = vmatprep.subr.mxu0 0.0
        %359 = vmatpush1.msra.mxu0 0.0
        %360 = vmatprep.subr.mxu0 0.0
        %361 = vmatpush1.msra.mxu0 0.0
        %362 = vmatprep.subr.mxu0 0.0
        %363 = vmatpush1.msra.mxu0 0.0
        %364 = vmatprep.subr.mxu0 0.0
        %365 = vmatpush1.msra.mxu0 0.0
        %366 = vmatprep.subr.mxu0 0.0
        %367 = vmatpush1.msra.mxu0 0.0
        %368 = vmatprep.subr.mxu0 0.0
        %369 = vmatpush1.msra.mxu0 0.0
        %370 = vmatprep.subr.mxu0 0.0
        %371 = vmatpush1.msra.mxu0 0.0
        %372 = vmatprep.subr.mxu0 0.0
        %373 = vmatpush1.msra.mxu0 0.0
        %374 = vmatprep.subr.mxu0 %v294
        %375 = vmatpush1.msra.mxu0 %v293
        %376 = vmatprep.subr.mxu0 0.0
        %377 = vmatpush2.msra.mxu0 0.0
        %378 = vmatprep.subr.mxu0 0.0
        %379 = vmatpush2.msra.mxu0 0.0
        %380 = vmatprep.subr.mxu0 0.0
        %381 = vmatpush2.msra.mxu0 0.0
        %382 = vmatprep.subr.mxu0 0.0
        %383 = vmatpush2.msra.mxu0 0.0
        %384 = vmatprep.subr.mxu0 0.0
        %385 = vmatpush2.msra.mxu0 0.0
        %386 = vmatprep.subr.mxu0 0.0
        %387 = vmatpush2.msra.mxu0 0.0
        %388 = vmatprep.subr.mxu0 0.0
        %389 = vmatpush2.msra.mxu0 0.0
        %390 = vmatprep.subr.mxu0 0.0
        %391 = vmatpush2.msra.mxu0 0.0
        %392 = vmatprep.subr.mxu0 0.0
        %393 = vmatpush2.msra.mxu0 0.0
        %394 = vmatprep.subr.mxu0 0.0
        %395 = vmatpush2.msra.mxu0 0.0
        %396 = vmatprep.subr.mxu0 0.0
        %397 = vmatpush2.msra.mxu0 0.0
        %398 = vmatprep.subr.mxu0 0.0
        %399 = vmatpush2.msra.mxu0 0.0
        %400 = vmatprep.subr.mxu0 0.0
        %401 = vmatpush2.msra.mxu0 0.0
        %402 = vmatprep.subr.mxu0 0.0
        %403 = vmatpush2.msra.mxu0 0.0
        %404 = vmatprep.subr.mxu0 0.0
        %405 = vmatpush2.msra.mxu0 0.0
        %406 = vmatprep.subr.mxu0 0.0
        %407 = vmatpush2.msra.mxu0 0.0
        %408 = vmatprep.mubr.f32.mxu0 0.0
        %409 = vmatmul.mubr.f32.gmra.mxu0 %v327
        %v410 = vpop.f32.mrf.mxu0
        %v411 = vadd.f32 %v298, %v410
        %v412 = vpop.f32.mrf.mxu0
        %v413 = vadd.f32 %v298, %v412
        %414 = vmatprep.mubr.f32.mxu0 0.0
        %415 = vmatmul.mubr.f32.gmra.mxu0 %v330
        %v416 = vpop.f32.mrf.mxu0
        %v417 = vadd.f32 %v303, %v416
        %v418 = vpop.f32.mrf.mxu0
        %v419 = vadd.f32 %v303, %v418
        %420 = vmatprep.mubr.f32.mxu0 0.0
        %421 = vmatmul.mubr.f32.gmra.mxu0 %v333
        %v422 = vpop.f32.mrf.mxu0
        %v423 = vadd.f32 %v308, %v422
        %v424 = vpop.f32.mrf.mxu0
        %v425 = vadd.f32 %v308, %v424
        %426 = vmatprep.mubr.f32.mxu0 0.0
        %427 = vmatmul.mubr.f32.gmra.mxu0 %v336
        %v428 = vpop.f32.mrf.mxu0
        %v429 = vadd.f32 %v313, %v428
        %v430 = vpop.f32.mrf.mxu0
        %v431 = vadd.f32 %v313, %v430
        %432 = vmatprep.mubr.f32.mxu0 0.0
        %433 = vmatmul.mubr.f32.gmra.mxu0 %v339
        %v434 = vpop.f32.mrf.mxu0
        %v435 = vadd.f32 %v318, %v434
        %v436 = vpop.f32.mrf.mxu0
        %v437 = vadd.f32 %v318, %v436
        %438 = vmatprep.mubr.f32.mxu0 0.0
        %439 = vmatmul.mubr.f32.gmra.mxu0 %v342
        %v440 = vpop.f32.mrf.mxu0
        %v441 = vadd.f32 %v323, %v440
        %v442 = vpop.f32.mrf.mxu0
        %v443 = vadd.f32 %v323, %v442
        %444 = vdwg.mxu0
        %v445 = vxor.u32 %v411, 2147483648
        %v446 = vxor.u32 %v413, 2147483648
        %v447 = vxor.u32 %v417, 2147483648
        %v448 = vxor.u32 %v419, 2147483648
        %v449 = vxor.u32 %v423, 2147483648
        %v450 = vxor.u32 %v425, 2147483648
        %v451 = vxor.u32 %v429, 2147483648
        %v452 = vxor.u32 %v431, 2147483648
        %v453 = vxor.u32 %v435, 2147483648
        %v454 = vxor.u32 %v437, 2147483648
        %v455 = vxor.u32 %v441, 2147483648
        %v456 = vxor.u32 %v443, 2147483648
        %v457 = vmul.f32 %v445, 1.442695
        %v458 = vpow.pop %v457
        %v459 = vmul.f32 %v446, 1.442695
        %v460 = vpow.pop %v459
        %v461 = vmul.f32 %v447, 1.442695
        %v462 = vpow.pop %v461
        %v463 = vmul.f32 %v448, 1.442695
        %v464 = vpow.pop %v463
        %v465 = vmul.f32 %v449, 1.442695
        %v466 = vpow.pop %v465
        %v467 = vmul.f32 %v450, 1.442695
        %v468 = vpow.pop %v467
        %v469 = vmul.f32 %v451, 1.442695
        %v470 = vpow.pop %v469
        %v471 = vmul.f32 %v452, 1.442695
        %v472 = vpow.pop %v471
        %v473 = vmul.f32 %v453, 1.442695
        %v474 = vpow.pop %v473
        %v475 = vmul.f32 %v454, 1.442695
        %v476 = vpow.pop %v475
        %v477 = vmul.f32 %v455, 1.442695
        %v478 = vpow.pop %v477
        %v479 = vmul.f32 %v456, 1.442695
        %v480 = vpow.pop %v479
        %v481 = vadd.f32 %v458, 1.0
        %v482 = vadd.f32 %v460, 1.0
        %v483 = vadd.f32 %v462, 1.0
        %v484 = vadd.f32 %v464, 1.0
        %v485 = vadd.f32 %v466, 1.0
        %v486 = vadd.f32 %v468, 1.0
        %v487 = vadd.f32 %v470, 1.0
        %v488 = vadd.f32 %v472, 1.0
        %v489 = vadd.f32 %v474, 1.0
        %v490 = vadd.f32 %v476, 1.0
        %v491 = vadd.f32 %v478, 1.0
        %v492 = vadd.f32 %v480, 1.0
        %v493 = vrcp.pop %v481
        %v494 = vmul.f32 1.0, %v493
        %v495 = vrcp.pop %v482
        %v496 = vmul.f32 1.0, %v495
        %v497 = vrcp.pop %v483
        %v498 = vmul.f32 1.0, %v497
        %v499 = vrcp.pop %v484
        %v500 = vmul.f32 1.0, %v499
        %v501 = vrcp.pop %v485
        %v502 = vmul.f32 1.0, %v501
        %v503 = vrcp.pop %v486
        %v504 = vmul.f32 1.0, %v503
        %v505 = vrcp.pop %v487
        %v506 = vmul.f32 1.0, %v505
        %v507 = vrcp.pop %v488
        %v508 = vmul.f32 1.0, %v507
        %v509 = vrcp.pop %v489
        %v510 = vmul.f32 1.0, %v509
        %v511 = vrcp.pop %v490
        %v512 = vmul.f32 1.0, %v511
        %v513 = vrcp.pop %v491
        %v514 = vmul.f32 1.0, %v513
        %v515 = vrcp.pop %v492
        %v516 = vmul.f32 1.0, %v515
        %v517 = vmul.f32 %v411, %v494
        %v518 = vmul.f32 %v413, %v496
        %v519 = vmul.f32 %v417, %v498
        %v520 = vmul.f32 %v419, %v500
        %v521 = vmul.f32 %v423, %v502
        %v522 = vmul.f32 %v425, %v504
        %v523 = vmul.f32 %v429, %v506
        %v524 = vmul.f32 %v431, %v508
        %v525 = vmul.f32 %v435, %v510
        %v526 = vmul.f32 %v437, %v512
        %v527 = vmul.f32 %v441, %v514
        %v528 = vmul.f32 %v443, %v516
        %529 = vrot.lane.b32.xlu0 %v517, 16
        %v530 = vpop.permute.xlu0 %529
        %531 = vrot.lane.b32.xlu0 %v519, 16
        %v532 = vpop.permute.xlu0 %531
        %533 = vrot.lane.b32.xlu0 %v521, 16
        %v534 = vpop.permute.xlu0 %533
        %535 = vrot.lane.b32.xlu0 %v523, 16
        %v536 = vpop.permute.xlu0 %535
        %537 = vrot.lane.b32.xlu0 %v525, 16
        %v538 = vpop.permute.xlu0 %537
        %539 = vrot.lane.b32.xlu0 %v527, 16
        %v540 = vpop.permute.xlu0 %539
        %541 = vrot.lane.b32.xlu0 %v518, 16
        %v542 = vpop.permute.xlu0 %541
        %543 = vrot.lane.b32.xlu0 %v520, 16
        %v544 = vpop.permute.xlu0 %543
        %545 = vrot.lane.b32.xlu0 %v522, 16
        %v546 = vpop.permute.xlu0 %545
        %547 = vrot.lane.b32.xlu0 %v524, 16
        %v548 = vpop.permute.xlu0 %547
        %549 = vrot.lane.b32.xlu0 %v526, 16
        %v550 = vpop.permute.xlu0 %549
        %551 = vrot.lane.b32.xlu0 %v528, 16
        %v552 = vpop.permute.xlu0 %551
        %v553 = vlaneseq
        %v554 = vand.u32 %v553, 127
        %vm555 = vcmp.lt.s32.totalorder %v554, 16
        %v556 = vsel %vm555, %v530, %v542
        %v557 = vsel %vm555, %v532, %v544
        %v558 = vsel %vm555, %v534, %v546
        %v559 = vsel %vm555, %v536, %v548
        %v560 = vsel %vm555, %v538, %v550
        %v561 = vsel %vm555, %v540, %v552
        %v562 = vsel %vm555, %v542, %v530
        %v563 = vsel %vm555, %v544, %v532
        %v564 = vsel %vm555, %v546, %v534
        %v565 = vsel %vm555, %v548, %v536
        %v566 = vsel %vm555, %v550, %v538
        %v567 = vsel %vm555, %v552, %v540
        %v569 = vlaneseq
        %v570 = vshrl.u32 %v569, 7
        %v571 = vsub.s32 0, %v570
        %v572 = vrot.slane %v277, %v571
        %v573 = vlaneseq
        %v574 = vshrl.u32 %v573, 7
        %v575 = vsub.s32 4, %v574
        %v576 = vrot.slane %v277, %v575
        %v579 = vlaneseq
        %v580 = vshrl.u32 %v579, 7
        %v581 = vsub.s32 0, %v580
        %v582 = vrot.slane %v572, %v581
        %v583 = vlaneseq
        %v584 = vshrl.u32 %v583, 7
        %v585 = vsub.s32 0, %v584
        %v586 = vrot.slane %v576, %v585
        %v587 = vmul.f32 %v562, %v582
        %v588 = vmul.f32 %v556, %v586
        %v589 = vmul.f32 %v563, %v582
        %v590 = vmul.f32 %v557, %v586
        %v591 = vmul.f32 %v564, %v582
        %v592 = vmul.f32 %v558, %v586
        %v593 = vmul.f32 %v565, %v582
        %v594 = vmul.f32 %v559, %v586
        %v595 = vmul.f32 %v566, %v582
        %v596 = vmul.f32 %v560, %v586
        %v597 = vmul.f32 %v567, %v582
        %v598 = vmul.f32 %v561, %v586
        %599 = vrot.lane.b32.xlu0 %v587, 1
        %v600 = vpop.permute.xlu0 %599
        %601 = vrot.lane.b32.xlu0 %v589, 1
        %v602 = vpop.permute.xlu0 %601
        %603 = vrot.lane.b32.xlu0 %v591, 1
        %v604 = vpop.permute.xlu0 %603
        %605 = vrot.lane.b32.xlu0 %v593, 1
        %v606 = vpop.permute.xlu0 %605
        %607 = vrot.lane.b32.xlu0 %v595, 1
        %v608 = vpop.permute.xlu0 %607
        %609 = vrot.lane.b32.xlu0 %v597, 1
        %v610 = vpop.permute.xlu0 %609
        %611 = vrot.lane.b32.xlu0 %v588, 1
        %v612 = vpop.permute.xlu0 %611
        %613 = vrot.lane.b32.xlu0 %v590, 1
        %v614 = vpop.permute.xlu0 %613
        %615 = vrot.lane.b32.xlu0 %v592, 1
        %v616 = vpop.permute.xlu0 %615
        %617 = vrot.lane.b32.xlu0 %v594, 1
        %v618 = vpop.permute.xlu0 %617
        %619 = vrot.lane.b32.xlu0 %v596, 1
        %v620 = vpop.permute.xlu0 %619
        %621 = vrot.lane.b32.xlu0 %v598, 1
        %v622 = vpop.permute.xlu0 %621
        %vm623 = vcmp.lt.s32.totalorder %v554, 1
        %v624 = vsel %vm623, %v600, %v612
        %v625 = vsel %vm623, %v602, %v614
        %v626 = vsel %vm623, %v604, %v616
        %v627 = vsel %vm623, %v606, %v618
        %v628 = vsel %vm623, %v608, %v620
        %v629 = vsel %vm623, %v610, %v622
        %v630 = vsel %vm623, %v612, %v600
        %v631 = vsel %vm623, %v614, %v602
        %v632 = vsel %vm623, %v616, %v604
        %v633 = vsel %vm623, %v618, %v606
        %v634 = vsel %vm623, %v620, %v608
        %v635 = vsel %vm623, %v622, %v610
        %v636 = vlaneseq
        %v637 = vshrl.u32 %v636, 7
        %v638 = vsub.s32 2, %v637
        %v639 = vrot.slane %v277, %v638
        %v640 = vlaneseq
        %v641 = vshrl.u32 %v640, 7
        %v642 = vsub.s32 6, %v641
        %v643 = vrot.slane %v277, %v642
        %v646 = vlaneseq
        %v647 = vshrl.u32 %v646, 7
        %v648 = vsub.s32 2, %v647
        %v649 = vrot.slane %v639, %v648
        %v650 = vlaneseq
        %v651 = vshrl.u32 %v650, 7
        %v652 = vsub.s32 2, %v651
        %v653 = vrot.slane %v643, %v652
        %v654 = vmul.f32 %v630, %v649
        %v655 = vmul.f32 %v624, %v653
        %v656 = vmul.f32 %v631, %v649
        %v657 = vmul.f32 %v625, %v653
        %v658 = vmul.f32 %v632, %v649
        %v659 = vmul.f32 %v626, %v653
        %v660 = vmul.f32 %v633, %v649
        %v661 = vmul.f32 %v627, %v653
        %v662 = vmul.f32 %v634, %v649
        %v663 = vmul.f32 %v628, %v653
        %v664 = vmul.f32 %v635, %v649
        %v665 = vmul.f32 %v629, %v653
        %666 = vset.pattern.permute.xlu0 1
        %667 = vperm.xlu0 %666, %v278
        %v668 = vpop.permute.xlu0 %667
        %670 = vset.pattern.permute.xlu0 1
        %671 = vperm.xlu0 %670, %v279
        %v672 = vpop.permute.xlu0 %671
        %674 = vset.pattern.permute.xlu0 1
        %675 = vperm.xlu0 %674, %v280
        %v676 = vpop.permute.xlu0 %675
        %678 = vset.pattern.permute.xlu0 1
        %679 = vperm.xlu0 %678, %v281
        %v680 = vpop.permute.xlu0 %679
        %682 = vset.pattern.permute.xlu0 1
        %683 = vperm.xlu0 %682, %v282
        %v684 = vpop.permute.xlu0 %683
        %686 = vset.pattern.permute.xlu0 1
        %687 = vperm.xlu0 %686, %v283
        %v688 = vpop.permute.xlu0 %687
        %v690 = vmul.f32 %v654, %v668
        %v691 = vmul.f32 %v655, %v668
        %v692 = vmul.f32 %v656, %v672
        %v693 = vmul.f32 %v657, %v672
        %v694 = vmul.f32 %v658, %v676
        %v695 = vmul.f32 %v659, %v676
        %v696 = vmul.f32 %v660, %v680
        %v697 = vmul.f32 %v661, %v680
        %v698 = vmul.f32 %v662, %v684
        %v699 = vmul.f32 %v663, %v684
        %v700 = vmul.f32 %v664, %v688
        %v701 = vmul.f32 %v665, %v688
        %v702 = vadd.f32 %v690, 0.0
        %v703 = vadd.f32 %v691, 0.0
        %v704 = vadd.f32 %v692, 0.0
        %v705 = vadd.f32 %v693, 0.0
        %v706 = vadd.f32 %v694, 0.0
        %v707 = vadd.f32 %v695, 0.0
        %v708 = vadd.f32 %v696, 0.0
        %v709 = vadd.f32 %v697, 0.0
        %v710 = vadd.f32 %v698, 0.0
        %v711 = vadd.f32 %v699, 0.0
        %v712 = vadd.f32 %v700, 0.0
        %v713 = vadd.f32 %v701, 0.0
        %714 = vset.pattern.permute.xlu0 2
        %715 = vperm.xlu0 %714, %v278
        %v716 = vpop.permute.xlu0 %715
        %718 = vset.pattern.permute.xlu0 2
        %719 = vperm.xlu0 %718, %v279
        %v720 = vpop.permute.xlu0 %719
        %722 = vset.pattern.permute.xlu0 2
        %723 = vperm.xlu0 %722, %v280
        %v724 = vpop.permute.xlu0 %723
        %726 = vset.pattern.permute.xlu0 2
        %727 = vperm.xlu0 %726, %v281
        %v728 = vpop.permute.xlu0 %727
        %730 = vset.pattern.permute.xlu0 2
        %731 = vperm.xlu0 %730, %v282
        %v732 = vpop.permute.xlu0 %731
        %734 = vset.pattern.permute.xlu0 2
        %735 = vperm.xlu0 %734, %v283
        %v736 = vpop.permute.xlu0 %735
        %v738 = vmul.f32 %v587, %v716
        %v739 = vmul.f32 %v588, %v716
        %v740 = vmul.f32 %v589, %v720
        %v741 = vmul.f32 %v590, %v720
        %v742 = vmul.f32 %v591, %v724
        %v743 = vmul.f32 %v592, %v724
        %v744 = vmul.f32 %v593, %v728
        %v745 = vmul.f32 %v594, %v728
        %v746 = vmul.f32 %v595, %v732
        %v747 = vmul.f32 %v596, %v732
        %v748 = vmul.f32 %v597, %v736
        %v749 = vmul.f32 %v598, %v736
        %v750 = vadd.f32 %v702, %v738
        %v751 = vadd.f32 %v703, %v739
        %v752 = vadd.f32 %v704, %v740
        %v753 = vadd.f32 %v705, %v741
        %v754 = vadd.f32 %v706, %v742
        %v755 = vadd.f32 %v707, %v743
        %v756 = vadd.f32 %v708, %v744
        %v757 = vadd.f32 %v709, %v745
        %v758 = vadd.f32 %v710, %v746
        %v759 = vadd.f32 %v711, %v747
        %v760 = vadd.f32 %v712, %v748
        %v761 = vadd.f32 %v713, %v749
        %762 = vrot.lane.b32.xlu0 %v587, 127
        %v763 = vpop.permute.xlu0 %762
        %764 = vrot.lane.b32.xlu0 %v589, 127
        %v765 = vpop.permute.xlu0 %764
        %766 = vrot.lane.b32.xlu0 %v591, 127
        %v767 = vpop.permute.xlu0 %766
        %768 = vrot.lane.b32.xlu0 %v593, 127
        %v769 = vpop.permute.xlu0 %768
        %770 = vrot.lane.b32.xlu0 %v595, 127
        %v771 = vpop.permute.xlu0 %770
        %772 = vrot.lane.b32.xlu0 %v597, 127
        %v773 = vpop.permute.xlu0 %772
        %774 = vrot.lane.b32.xlu0 %v588, 127
        %v775 = vpop.permute.xlu0 %774
        %776 = vrot.lane.b32.xlu0 %v590, 127
        %v777 = vpop.permute.xlu0 %776
        %778 = vrot.lane.b32.xlu0 %v592, 127
        %v779 = vpop.permute.xlu0 %778
        %780 = vrot.lane.b32.xlu0 %v594, 127
        %v781 = vpop.permute.xlu0 %780
        %782 = vrot.lane.b32.xlu0 %v596, 127
        %v783 = vpop.permute.xlu0 %782
        %784 = vrot.lane.b32.xlu0 %v598, 127
        %v785 = vpop.permute.xlu0 %784
        %vm786 = vcmp.lt.s32.totalorder %v554, 127
        %v787 = vsel %vm786, %v763, %v775
        %v788 = vsel %vm786, %v765, %v777
        %v789 = vsel %vm786, %v767, %v779
        %v790 = vsel %vm786, %v769, %v781
        %v791 = vsel %vm786, %v771, %v783
        %v792 = vsel %vm786, %v773, %v785
        %v793 = vsel %vm786, %v775, %v763
        %v794 = vsel %vm786, %v777, %v765
        %v795 = vsel %vm786, %v779, %v767
        %v796 = vsel %vm786, %v781, %v769
        %v797 = vsel %vm786, %v783, %v771
        %v798 = vsel %vm786, %v785, %v773
        %v799 = vlaneseq
        %v800 = vshrl.u32 %v799, 7
        %v801 = vsub.s32 3, %v800
        %v802 = vrot.slane %v277, %v801
        %v803 = vlaneseq
        %v804 = vshrl.u32 %v803, 7
        %v805 = vsub.s32 7, %v804
        %v806 = vrot.slane %v277, %v805
        %v809 = vlaneseq
        %v810 = vshrl.u32 %v809, 7
        %v811 = vsub.s32 3, %v810
        %v812 = vrot.slane %v802, %v811
        %v813 = vlaneseq
        %v814 = vshrl.u32 %v813, 7
        %v815 = vsub.s32 3, %v814
        %v816 = vrot.slane %v806, %v815
        %v817 = vmul.f32 %v787, %v812
        %v818 = vmul.f32 %v793, %v816
        %v819 = vmul.f32 %v788, %v812
        %v820 = vmul.f32 %v794, %v816
        %v821 = vmul.f32 %v789, %v812
        %v822 = vmul.f32 %v795, %v816
        %v823 = vmul.f32 %v790, %v812
        %v824 = vmul.f32 %v796, %v816
        %v825 = vmul.f32 %v791, %v812
        %v826 = vmul.f32 %v797, %v816
        %v827 = vmul.f32 %v792, %v812
        %v828 = vmul.f32 %v798, %v816
        %829 = vset.pattern.permute.xlu0 3
        %830 = vperm.xlu0 %829, %v278
        %v831 = vpop.permute.xlu0 %830
        %833 = vset.pattern.permute.xlu0 3
        %834 = vperm.xlu0 %833, %v279
        %v835 = vpop.permute.xlu0 %834
        %837 = vset.pattern.permute.xlu0 3
        %838 = vperm.xlu0 %837, %v280
        %v839 = vpop.permute.xlu0 %838
        %841 = vset.pattern.permute.xlu0 3
        %842 = vperm.xlu0 %841, %v281
        %v843 = vpop.permute.xlu0 %842
        %845 = vset.pattern.permute.xlu0 3
        %846 = vperm.xlu0 %845, %v282
        %v847 = vpop.permute.xlu0 %846
        %849 = vset.pattern.permute.xlu0 3
        %850 = vperm.xlu0 %849, %v283
        %v851 = vpop.permute.xlu0 %850
        %v853 = vmul.f32 %v817, %v831
        %v854 = vmul.f32 %v818, %v831
        %v855 = vmul.f32 %v819, %v835
        %v856 = vmul.f32 %v820, %v835
        %v857 = vmul.f32 %v821, %v839
        %v858 = vmul.f32 %v822, %v839
        %v859 = vmul.f32 %v823, %v843
        %v860 = vmul.f32 %v824, %v843
        %v861 = vmul.f32 %v825, %v847
        %v862 = vmul.f32 %v826, %v847
        %v863 = vmul.f32 %v827, %v851
        %v864 = vmul.f32 %v828, %v851
        %v865 = vadd.f32 %v750, %v853
        %v866 = vadd.f32 %v751, %v854
        %v867 = vadd.f32 %v752, %v855
        %v868 = vadd.f32 %v753, %v856
        %v869 = vadd.f32 %v754, %v857
        %v870 = vadd.f32 %v755, %v858
        %v871 = vadd.f32 %v756, %v859
        %v872 = vadd.f32 %v757, %v860
        %v873 = vadd.f32 %v758, %v861
        %v874 = vadd.f32 %v759, %v862
        %v875 = vadd.f32 %v760, %v863
        %v876 = vadd.f32 %v761, %v864
        %877 = vrot.lane.b32.xlu0 %v517, 1
        %v878 = vpop.permute.xlu0 %877
        %879 = vrot.lane.b32.xlu0 %v519, 1
        %v880 = vpop.permute.xlu0 %879
        %881 = vrot.lane.b32.xlu0 %v521, 1
        %v882 = vpop.permute.xlu0 %881
        %883 = vrot.lane.b32.xlu0 %v523, 1
        %v884 = vpop.permute.xlu0 %883
        %885 = vrot.lane.b32.xlu0 %v525, 1
        %v886 = vpop.permute.xlu0 %885
        %887 = vrot.lane.b32.xlu0 %v527, 1
        %v888 = vpop.permute.xlu0 %887
        %889 = vrot.lane.b32.xlu0 %v518, 1
        %v890 = vpop.permute.xlu0 %889
        %891 = vrot.lane.b32.xlu0 %v520, 1
        %v892 = vpop.permute.xlu0 %891
        %893 = vrot.lane.b32.xlu0 %v522, 1
        %v894 = vpop.permute.xlu0 %893
        %895 = vrot.lane.b32.xlu0 %v524, 1
        %v896 = vpop.permute.xlu0 %895
        %897 = vrot.lane.b32.xlu0 %v526, 1
        %v898 = vpop.permute.xlu0 %897
        %899 = vrot.lane.b32.xlu0 %v528, 1
        %v900 = vpop.permute.xlu0 %899
        %v901 = vsel %vm623, %v878, %v890
        %v902 = vsel %vm623, %v880, %v892
        %v903 = vsel %vm623, %v882, %v894
        %v904 = vsel %vm623, %v884, %v896
        %v905 = vsel %vm623, %v886, %v898
        %v906 = vsel %vm623, %v888, %v900
        %v907 = vsel %vm623, %v890, %v878
        %v908 = vsel %vm623, %v892, %v880
        %v909 = vsel %vm623, %v894, %v882
        %v910 = vsel %vm623, %v896, %v884
        %v911 = vsel %vm623, %v898, %v886
        %v912 = vsel %vm623, %v900, %v888
        %v913 = vmul.f32 %v907, %v649
        %v914 = vmul.f32 %v901, %v653
        %v915 = vmul.f32 %v908, %v649
        %v916 = vmul.f32 %v902, %v653
        %v917 = vmul.f32 %v909, %v649
        %v918 = vmul.f32 %v903, %v653
        %v919 = vmul.f32 %v910, %v649
        %v920 = vmul.f32 %v904, %v653
        %v921 = vmul.f32 %v911, %v649
        %v922 = vmul.f32 %v905, %v653
        %v923 = vmul.f32 %v912, %v649
        %v924 = vmul.f32 %v906, %v653
        %925 = vset.pattern.permute.xlu0 4
        %926 = vperm.xlu0 %925, %v278
        %v927 = vpop.permute.xlu0 %926
        %929 = vset.pattern.permute.xlu0 4
        %930 = vperm.xlu0 %929, %v279
        %v931 = vpop.permute.xlu0 %930
        %933 = vset.pattern.permute.xlu0 4
        %934 = vperm.xlu0 %933, %v280
        %v935 = vpop.permute.xlu0 %934
        %937 = vset.pattern.permute.xlu0 4
        %938 = vperm.xlu0 %937, %v281
        %v939 = vpop.permute.xlu0 %938
        %941 = vset.pattern.permute.xlu0 4
        %942 = vperm.xlu0 %941, %v282
        %v943 = vpop.permute.xlu0 %942
        %945 = vset.pattern.permute.xlu0 4
        %946 = vperm.xlu0 %945, %v283
        %v947 = vpop.permute.xlu0 %946
        %v949 = vmul.f32 %v913, %v927
        %v950 = vmul.f32 %v914, %v927
        %v951 = vmul.f32 %v915, %v931
        %v952 = vmul.f32 %v916, %v931
        %v953 = vmul.f32 %v917, %v935
        %v954 = vmul.f32 %v918, %v935
        %v955 = vmul.f32 %v919, %v939
        %v956 = vmul.f32 %v920, %v939
        %v957 = vmul.f32 %v921, %v943
        %v958 = vmul.f32 %v922, %v943
        %v959 = vmul.f32 %v923, %v947
        %v960 = vmul.f32 %v924, %v947
        %v961 = vadd.f32 %v865, %v949
        %v962 = vadd.f32 %v866, %v950
        %v963 = vadd.f32 %v867, %v951
        %v964 = vadd.f32 %v868, %v952
        %v965 = vadd.f32 %v869, %v953
        %v966 = vadd.f32 %v870, %v954
        %v967 = vadd.f32 %v871, %v955
        %v968 = vadd.f32 %v872, %v956
        %v969 = vadd.f32 %v873, %v957
        %v970 = vadd.f32 %v874, %v958
        %v971 = vadd.f32 %v875, %v959
        %v972 = vadd.f32 %v876, %v960
        %973 = vset.pattern.permute.xlu0 5
        %974 = vperm.xlu0 %973, %v278
        %v975 = vpop.permute.xlu0 %974
        %977 = vset.pattern.permute.xlu0 5
        %978 = vperm.xlu0 %977, %v279
        %v979 = vpop.permute.xlu0 %978
        %981 = vset.pattern.permute.xlu0 5
        %982 = vperm.xlu0 %981, %v280
        %v983 = vpop.permute.xlu0 %982
        %985 = vset.pattern.permute.xlu0 5
        %986 = vperm.xlu0 %985, %v281
        %v987 = vpop.permute.xlu0 %986
        %989 = vset.pattern.permute.xlu0 5
        %990 = vperm.xlu0 %989, %v282
        %v991 = vpop.permute.xlu0 %990
        %993 = vset.pattern.permute.xlu0 5
        %994 = vperm.xlu0 %993, %v283
        %v995 = vpop.permute.xlu0 %994
        %v997 = vmul.f32 %v517, %v975
        %v998 = vmul.f32 %v518, %v975
        %v999 = vmul.f32 %v519, %v979
        %v1000 = vmul.f32 %v520, %v979
        %v1001 = vmul.f32 %v521, %v983
        %v1002 = vmul.f32 %v522, %v983
        %v1003 = vmul.f32 %v523, %v987
        %v1004 = vmul.f32 %v524, %v987
        %v1005 = vmul.f32 %v525, %v991
        %v1006 = vmul.f32 %v526, %v991
        %v1007 = vmul.f32 %v527, %v995
        %v1008 = vmul.f32 %v528, %v995
        %v1009 = vadd.f32 %v961, %v997
        %v1010 = vadd.f32 %v962, %v998
        %v1011 = vadd.f32 %v963, %v999
        %v1012 = vadd.f32 %v964, %v1000
        %v1013 = vadd.f32 %v965, %v1001
        %v1014 = vadd.f32 %v966, %v1002
        %v1015 = vadd.f32 %v967, %v1003
        %v1016 = vadd.f32 %v968, %v1004
        %v1017 = vadd.f32 %v969, %v1005
        %v1018 = vadd.f32 %v970, %v1006
        %v1019 = vadd.f32 %v971, %v1007
        %v1020 = vadd.f32 %v972, %v1008
        %1021 = vrot.lane.b32.xlu0 %v517, 127
        %v1022 = vpop.permute.xlu0 %1021
        %1023 = vrot.lane.b32.xlu0 %v519, 127
        %v1024 = vpop.permute.xlu0 %1023
        %1025 = vrot.lane.b32.xlu0 %v521, 127
        %v1026 = vpop.permute.xlu0 %1025
        %1027 = vrot.lane.b32.xlu0 %v523, 127
        %v1028 = vpop.permute.xlu0 %1027
        %1029 = vrot.lane.b32.xlu0 %v525, 127
        %v1030 = vpop.permute.xlu0 %1029
        %1031 = vrot.lane.b32.xlu0 %v527, 127
        %v1032 = vpop.permute.xlu0 %1031
        %1033 = vrot.lane.b32.xlu0 %v518, 127
        %v1034 = vpop.permute.xlu0 %1033
        %1035 = vrot.lane.b32.xlu0 %v520, 127
        %v1036 = vpop.permute.xlu0 %1035
        %1037 = vrot.lane.b32.xlu0 %v522, 127
        %v1038 = vpop.permute.xlu0 %1037
        %1039 = vrot.lane.b32.xlu0 %v524, 127
        %v1040 = vpop.permute.xlu0 %1039
        %1041 = vrot.lane.b32.xlu0 %v526, 127
        %v1042 = vpop.permute.xlu0 %1041
        %1043 = vrot.lane.b32.xlu0 %v528, 127
        %v1044 = vpop.permute.xlu0 %1043
        %v1045 = vsel %vm786, %v1022, %v1034
        %v1046 = vsel %vm786, %v1024, %v1036
        %v1047 = vsel %vm786, %v1026, %v1038
        %v1048 = vsel %vm786, %v1028, %v1040
        %v1049 = vsel %vm786, %v1030, %v1042
        %v1050 = vsel %vm786, %v1032, %v1044
        %v1051 = vsel %vm786, %v1034, %v1022
        %v1052 = vsel %vm786, %v1036, %v1024
        %v1053 = vsel %vm786, %v1038, %v1026
        %v1054 = vsel %vm786, %v1040, %v1028
        %v1055 = vsel %vm786, %v1042, %v1030
        %v1056 = vsel %vm786, %v1044, %v1032
        %v1057 = vmul.f32 %v1045, %v812
        %v1058 = vmul.f32 %v1051, %v816
        %v1059 = vmul.f32 %v1046, %v812
        %v1060 = vmul.f32 %v1052, %v816
        %v1061 = vmul.f32 %v1047, %v812
        %v1062 = vmul.f32 %v1053, %v816
        %v1063 = vmul.f32 %v1048, %v812
        %v1064 = vmul.f32 %v1054, %v816
        %v1065 = vmul.f32 %v1049, %v812
        %v1066 = vmul.f32 %v1055, %v816
        %v1067 = vmul.f32 %v1050, %v812
        %v1068 = vmul.f32 %v1056, %v816
        %1069 = vset.pattern.permute.xlu0 6
        %1070 = vperm.xlu0 %1069, %v278
        %v1071 = vpop.permute.xlu0 %1070
        %1073 = vset.pattern.permute.xlu0 6
        %1074 = vperm.xlu0 %1073, %v279
        %v1075 = vpop.permute.xlu0 %1074
        %1077 = vset.pattern.permute.xlu0 6
        %1078 = vperm.xlu0 %1077, %v280
        %v1079 = vpop.permute.xlu0 %1078
        %1081 = vset.pattern.permute.xlu0 6
        %1082 = vperm.xlu0 %1081, %v281
        %v1083 = vpop.permute.xlu0 %1082
        %1085 = vset.pattern.permute.xlu0 6
        %1086 = vperm.xlu0 %1085, %v282
        %v1087 = vpop.permute.xlu0 %1086
        %1089 = vset.pattern.permute.xlu0 6
        %1090 = vperm.xlu0 %1089, %v283
        %v1091 = vpop.permute.xlu0 %1090
        %v1093 = vmul.f32 %v1057, %v1071
        %v1094 = vmul.f32 %v1058, %v1071
        %v1095 = vmul.f32 %v1059, %v1075
        %v1096 = vmul.f32 %v1060, %v1075
        %v1097 = vmul.f32 %v1061, %v1079
        %v1098 = vmul.f32 %v1062, %v1079
        %v1099 = vmul.f32 %v1063, %v1083
        %v1100 = vmul.f32 %v1064, %v1083
        %v1101 = vmul.f32 %v1065, %v1087
        %v1102 = vmul.f32 %v1066, %v1087
        %v1103 = vmul.f32 %v1067, %v1091
        %v1104 = vmul.f32 %v1068, %v1091
        %v1105 = vadd.f32 %v1009, %v1093
        %v1106 = vadd.f32 %v1010, %v1094
        %v1107 = vadd.f32 %v1011, %v1095
        %v1108 = vadd.f32 %v1012, %v1096
        %v1109 = vadd.f32 %v1013, %v1097
        %v1110 = vadd.f32 %v1014, %v1098
        %v1111 = vadd.f32 %v1015, %v1099
        %v1112 = vadd.f32 %v1016, %v1100
        %v1113 = vadd.f32 %v1017, %v1101
        %v1114 = vadd.f32 %v1018, %v1102
        %v1115 = vadd.f32 %v1019, %v1103
        %v1116 = vadd.f32 %v1020, %v1104
        %1117 = vrot.lane.b32.xlu0 %v517, 112
        %v1118 = vpop.permute.xlu0 %1117
        %1119 = vrot.lane.b32.xlu0 %v519, 112
        %v1120 = vpop.permute.xlu0 %1119
        %1121 = vrot.lane.b32.xlu0 %v521, 112
        %v1122 = vpop.permute.xlu0 %1121
        %1123 = vrot.lane.b32.xlu0 %v523, 112
        %v1124 = vpop.permute.xlu0 %1123
        %1125 = vrot.lane.b32.xlu0 %v525, 112
        %v1126 = vpop.permute.xlu0 %1125
        %1127 = vrot.lane.b32.xlu0 %v527, 112
        %v1128 = vpop.permute.xlu0 %1127
        %1129 = vrot.lane.b32.xlu0 %v518, 112
        %v1130 = vpop.permute.xlu0 %1129
        %1131 = vrot.lane.b32.xlu0 %v520, 112
        %v1132 = vpop.permute.xlu0 %1131
        %1133 = vrot.lane.b32.xlu0 %v522, 112
        %v1134 = vpop.permute.xlu0 %1133
        %1135 = vrot.lane.b32.xlu0 %v524, 112
        %v1136 = vpop.permute.xlu0 %1135
        %1137 = vrot.lane.b32.xlu0 %v526, 112
        %v1138 = vpop.permute.xlu0 %1137
        %1139 = vrot.lane.b32.xlu0 %v528, 112
        %v1140 = vpop.permute.xlu0 %1139
        %vm1141 = vcmp.lt.s32.totalorder %v554, 112
        %v1142 = vsel %vm1141, %v1118, %v1130
        %v1143 = vsel %vm1141, %v1120, %v1132
        %v1144 = vsel %vm1141, %v1122, %v1134
        %v1145 = vsel %vm1141, %v1124, %v1136
        %v1146 = vsel %vm1141, %v1126, %v1138
        %v1147 = vsel %vm1141, %v1128, %v1140
        %v1148 = vsel %vm1141, %v1130, %v1118
        %v1149 = vsel %vm1141, %v1132, %v1120
        %v1150 = vsel %vm1141, %v1134, %v1122
        %v1151 = vsel %vm1141, %v1136, %v1124
        %v1152 = vsel %vm1141, %v1138, %v1126
        %v1153 = vsel %vm1141, %v1140, %v1128
        %v1154 = vlaneseq
        %v1155 = vshrl.u32 %v1154, 7
        %v1156 = vsub.s32 1, %v1155
        %v1157 = vrot.slane %v277, %v1156
        %v1158 = vlaneseq
        %v1159 = vshrl.u32 %v1158, 7
        %v1160 = vsub.s32 5, %v1159
        %v1161 = vrot.slane %v277, %v1160
        %v1164 = vlaneseq
        %v1165 = vshrl.u32 %v1164, 7
        %v1166 = vsub.s32 1, %v1165
        %v1167 = vrot.slane %v1157, %v1166
        %v1168 = vlaneseq
        %v1169 = vshrl.u32 %v1168, 7
        %v1170 = vsub.s32 1, %v1169
        %v1171 = vrot.slane %v1161, %v1170
        %v1172 = vmul.f32 %v1142, %v1167
        %v1173 = vmul.f32 %v1148, %v1171
        %v1174 = vmul.f32 %v1143, %v1167
        %v1175 = vmul.f32 %v1149, %v1171
        %v1176 = vmul.f32 %v1144, %v1167
        %v1177 = vmul.f32 %v1150, %v1171
        %v1178 = vmul.f32 %v1145, %v1167
        %v1179 = vmul.f32 %v1151, %v1171
        %v1180 = vmul.f32 %v1146, %v1167
        %v1181 = vmul.f32 %v1152, %v1171
        %v1182 = vmul.f32 %v1147, %v1167
        %v1183 = vmul.f32 %v1153, %v1171
        %1184 = vrot.lane.b32.xlu0 %v1172, 1
        %v1185 = vpop.permute.xlu0 %1184
        %1186 = vrot.lane.b32.xlu0 %v1174, 1
        %v1187 = vpop.permute.xlu0 %1186
        %1188 = vrot.lane.b32.xlu0 %v1176, 1
        %v1189 = vpop.permute.xlu0 %1188
        %1190 = vrot.lane.b32.xlu0 %v1178, 1
        %v1191 = vpop.permute.xlu0 %1190
        %1192 = vrot.lane.b32.xlu0 %v1180, 1
        %v1193 = vpop.permute.xlu0 %1192
        %1194 = vrot.lane.b32.xlu0 %v1182, 1
        %v1195 = vpop.permute.xlu0 %1194
        %1196 = vrot.lane.b32.xlu0 %v1173, 1
        %v1197 = vpop.permute.xlu0 %1196
        %1198 = vrot.lane.b32.xlu0 %v1175, 1
        %v1199 = vpop.permute.xlu0 %1198
        %1200 = vrot.lane.b32.xlu0 %v1177, 1
        %v1201 = vpop.permute.xlu0 %1200
        %1202 = vrot.lane.b32.xlu0 %v1179, 1
        %v1203 = vpop.permute.xlu0 %1202
        %1204 = vrot.lane.b32.xlu0 %v1181, 1
        %v1205 = vpop.permute.xlu0 %1204
        %1206 = vrot.lane.b32.xlu0 %v1183, 1
        %v1207 = vpop.permute.xlu0 %1206
        %v1208 = vsel %vm623, %v1185, %v1197
        %v1209 = vsel %vm623, %v1187, %v1199
        %v1210 = vsel %vm623, %v1189, %v1201
        %v1211 = vsel %vm623, %v1191, %v1203
        %v1212 = vsel %vm623, %v1193, %v1205
        %v1213 = vsel %vm623, %v1195, %v1207
        %v1214 = vsel %vm623, %v1197, %v1185
        %v1215 = vsel %vm623, %v1199, %v1187
        %v1216 = vsel %vm623, %v1201, %v1189
        %v1217 = vsel %vm623, %v1203, %v1191
        %v1218 = vsel %vm623, %v1205, %v1193
        %v1219 = vsel %vm623, %v1207, %v1195
        %v1220 = vmul.f32 %v1214, %v649
        %v1221 = vmul.f32 %v1208, %v653
        %v1222 = vmul.f32 %v1215, %v649
        %v1223 = vmul.f32 %v1209, %v653
        %v1224 = vmul.f32 %v1216, %v649
        %v1225 = vmul.f32 %v1210, %v653
        %v1226 = vmul.f32 %v1217, %v649
        %v1227 = vmul.f32 %v1211, %v653
        %v1228 = vmul.f32 %v1218, %v649
        %v1229 = vmul.f32 %v1212, %v653
        %v1230 = vmul.f32 %v1219, %v649
        %v1231 = vmul.f32 %v1213, %v653
        %1232 = vset.pattern.permute.xlu0 7
        %1233 = vperm.xlu0 %1232, %v278
        %v1234 = vpop.permute.xlu0 %1233
        %1236 = vset.pattern.permute.xlu0 7
        %1237 = vperm.xlu0 %1236, %v279
        %v1238 = vpop.permute.xlu0 %1237
        %1240 = vset.pattern.permute.xlu0 7
        %1241 = vperm.xlu0 %1240, %v280
        %v1242 = vpop.permute.xlu0 %1241
        %1244 = vset.pattern.permute.xlu0 7
        %1245 = vperm.xlu0 %1244, %v281
        %v1246 = vpop.permute.xlu0 %1245
        %1248 = vset.pattern.permute.xlu0 7
        %1249 = vperm.xlu0 %1248, %v282
        %v1250 = vpop.permute.xlu0 %1249
        %1252 = vset.pattern.permute.xlu0 7
        %1253 = vperm.xlu0 %1252, %v283
        %v1254 = vpop.permute.xlu0 %1253
        %v1256 = vmul.f32 %v1220, %v1234
        %v1257 = vmul.f32 %v1221, %v1234
        %v1258 = vmul.f32 %v1222, %v1238
        %v1259 = vmul.f32 %v1223, %v1238
        %v1260 = vmul.f32 %v1224, %v1242
        %v1261 = vmul.f32 %v1225, %v1242
        %v1262 = vmul.f32 %v1226, %v1246
        %v1263 = vmul.f32 %v1227, %v1246
        %v1264 = vmul.f32 %v1228, %v1250
        %v1265 = vmul.f32 %v1229, %v1250
        %v1266 = vmul.f32 %v1230, %v1254
        %v1267 = vmul.f32 %v1231, %v1254
        %v1268 = vadd.f32 %v1105, %v1256
        %v1269 = vadd.f32 %v1106, %v1257
        %v1270 = vadd.f32 %v1107, %v1258
        %v1271 = vadd.f32 %v1108, %v1259
        %v1272 = vadd.f32 %v1109, %v1260
        %v1273 = vadd.f32 %v1110, %v1261
        %v1274 = vadd.f32 %v1111, %v1262
        %v1275 = vadd.f32 %v1112, %v1263
        %v1276 = vadd.f32 %v1113, %v1264
        %v1277 = vadd.f32 %v1114, %v1265
        %v1278 = vadd.f32 %v1115, %v1266
        %v1279 = vadd.f32 %v1116, %v1267
        %1280 = vset.pattern.permute.xlu0 8
        %1281 = vperm.xlu0 %1280, %v278
        %v1282 = vpop.permute.xlu0 %1281
        %1284 = vset.pattern.permute.xlu0 8
        %1285 = vperm.xlu0 %1284, %v279
        %v1286 = vpop.permute.xlu0 %1285
        %1288 = vset.pattern.permute.xlu0 8
        %1289 = vperm.xlu0 %1288, %v280
        %v1290 = vpop.permute.xlu0 %1289
        %1292 = vset.pattern.permute.xlu0 8
        %1293 = vperm.xlu0 %1292, %v281
        %v1294 = vpop.permute.xlu0 %1293
        %1296 = vset.pattern.permute.xlu0 8
        %1297 = vperm.xlu0 %1296, %v282
        %v1298 = vpop.permute.xlu0 %1297
        %1300 = vset.pattern.permute.xlu0 8
        %1301 = vperm.xlu0 %1300, %v283
        %v1302 = vpop.permute.xlu0 %1301
        %v1304 = vmul.f32 %v1172, %v1282
        %v1305 = vmul.f32 %v1173, %v1282
        %v1306 = vmul.f32 %v1174, %v1286
        %v1307 = vmul.f32 %v1175, %v1286
        %v1308 = vmul.f32 %v1176, %v1290
        %v1309 = vmul.f32 %v1177, %v1290
        %v1310 = vmul.f32 %v1178, %v1294
        %v1311 = vmul.f32 %v1179, %v1294
        %v1312 = vmul.f32 %v1180, %v1298
        %v1313 = vmul.f32 %v1181, %v1298
        %v1314 = vmul.f32 %v1182, %v1302
        %v1315 = vmul.f32 %v1183, %v1302
        %v1316 = vadd.f32 %v1268, %v1304
        %v1317 = vadd.f32 %v1269, %v1305
        %v1318 = vadd.f32 %v1270, %v1306
        %v1319 = vadd.f32 %v1271, %v1307
        %v1320 = vadd.f32 %v1272, %v1308
        %v1321 = vadd.f32 %v1273, %v1309
        %v1322 = vadd.f32 %v1274, %v1310
        %v1323 = vadd.f32 %v1275, %v1311
        %v1324 = vadd.f32 %v1276, %v1312
        %v1325 = vadd.f32 %v1277, %v1313
        %v1326 = vadd.f32 %v1278, %v1314
        %v1327 = vadd.f32 %v1279, %v1315
        %1328 = vrot.lane.b32.xlu0 %v1172, 127
        %v1329 = vpop.permute.xlu0 %1328
        %1330 = vrot.lane.b32.xlu0 %v1174, 127
        %v1331 = vpop.permute.xlu0 %1330
        %1332 = vrot.lane.b32.xlu0 %v1176, 127
        %v1333 = vpop.permute.xlu0 %1332
        %1334 = vrot.lane.b32.xlu0 %v1178, 127
        %v1335 = vpop.permute.xlu0 %1334
        %1336 = vrot.lane.b32.xlu0 %v1180, 127
        %v1337 = vpop.permute.xlu0 %1336
        %1338 = vrot.lane.b32.xlu0 %v1182, 127
        %v1339 = vpop.permute.xlu0 %1338
        %1340 = vrot.lane.b32.xlu0 %v1173, 127
        %v1341 = vpop.permute.xlu0 %1340
        %1342 = vrot.lane.b32.xlu0 %v1175, 127
        %v1343 = vpop.permute.xlu0 %1342
        %1344 = vrot.lane.b32.xlu0 %v1177, 127
        %v1345 = vpop.permute.xlu0 %1344
        %1346 = vrot.lane.b32.xlu0 %v1179, 127
        %v1347 = vpop.permute.xlu0 %1346
        %1348 = vrot.lane.b32.xlu0 %v1181, 127
        %v1349 = vpop.permute.xlu0 %1348
        %1350 = vrot.lane.b32.xlu0 %v1183, 127
        %v1351 = vpop.permute.xlu0 %1350
        %v1352 = vsel %vm786, %v1329, %v1341
        %v1353 = vsel %vm786, %v1331, %v1343
        %v1354 = vsel %vm786, %v1333, %v1345
        %v1355 = vsel %vm786, %v1335, %v1347
        %v1356 = vsel %vm786, %v1337, %v1349
        %v1357 = vsel %vm786, %v1339, %v1351
        %v1358 = vsel %vm786, %v1341, %v1329
        %v1359 = vsel %vm786, %v1343, %v1331
        %v1360 = vsel %vm786, %v1345, %v1333
        %v1361 = vsel %vm786, %v1347, %v1335
        %v1362 = vsel %vm786, %v1349, %v1337
        %v1363 = vsel %vm786, %v1351, %v1339
        %v1364 = vmul.f32 %v1352, %v812
        %v1365 = vmul.f32 %v1358, %v816
        %v1366 = vmul.f32 %v1353, %v812
        %v1367 = vmul.f32 %v1359, %v816
        %v1368 = vmul.f32 %v1354, %v812
        %v1369 = vmul.f32 %v1360, %v816
        %v1370 = vmul.f32 %v1355, %v812
        %v1371 = vmul.f32 %v1361, %v816
        %v1372 = vmul.f32 %v1356, %v812
        %v1373 = vmul.f32 %v1362, %v816
        %v1374 = vmul.f32 %v1357, %v812
        %v1375 = vmul.f32 %v1363, %v816
        %1376 = vset.pattern.permute.xlu0 9
        %1377 = vperm.xlu0 %1376, %v278
        %v1378 = vpop.permute.xlu0 %1377
        %1380 = vset.pattern.permute.xlu0 9
        %1381 = vperm.xlu0 %1380, %v279
        %v1382 = vpop.permute.xlu0 %1381
        %1384 = vset.pattern.permute.xlu0 9
        %1385 = vperm.xlu0 %1384, %v280
        %v1386 = vpop.permute.xlu0 %1385
        %1388 = vset.pattern.permute.xlu0 9
        %1389 = vperm.xlu0 %1388, %v281
        %v1390 = vpop.permute.xlu0 %1389
        %1392 = vset.pattern.permute.xlu0 9
        %1393 = vperm.xlu0 %1392, %v282
        %v1394 = vpop.permute.xlu0 %1393
        %1396 = vset.pattern.permute.xlu0 9
        %1397 = vperm.xlu0 %1396, %v283
        %v1398 = vpop.permute.xlu0 %1397
        %v1400 = vmul.f32 %v1364, %v1378
        %v1401 = vmul.f32 %v1365, %v1378
        %v1402 = vmul.f32 %v1366, %v1382
        %v1403 = vmul.f32 %v1367, %v1382
        %v1404 = vmul.f32 %v1368, %v1386
        %v1405 = vmul.f32 %v1369, %v1386
        %v1406 = vmul.f32 %v1370, %v1390
        %v1407 = vmul.f32 %v1371, %v1390
        %v1408 = vmul.f32 %v1372, %v1394
        %v1409 = vmul.f32 %v1373, %v1394
        %v1410 = vmul.f32 %v1374, %v1398
        %v1411 = vmul.f32 %v1375, %v1398
        %v1412 = vadd.f32 %v1316, %v1400
        %v1413 = vadd.f32 %v1317, %v1401
        %v1414 = vadd.f32 %v1318, %v1402
        %v1415 = vadd.f32 %v1319, %v1403
        %v1416 = vadd.f32 %v1320, %v1404
        %v1417 = vadd.f32 %v1321, %v1405
        %v1418 = vadd.f32 %v1322, %v1406
        %v1419 = vadd.f32 %v1323, %v1407
        %v1420 = vadd.f32 %v1324, %v1408
        %v1421 = vadd.f32 %v1325, %v1409
        %v1422 = vadd.f32 %v1326, %v1410
        %v1423 = vadd.f32 %v1327, %v1411
        %1424 = vset.pattern.permute.xlu0 10
        %1425 = vperm.xlu0 %1424, %v278
        %v1426 = vpop.permute.xlu0 %1425
        %1428 = vset.pattern.permute.xlu0 10
        %1429 = vperm.xlu0 %1428, %v279
        %v1430 = vpop.permute.xlu0 %1429
        %1432 = vset.pattern.permute.xlu0 10
        %1433 = vperm.xlu0 %1432, %v280
        %v1434 = vpop.permute.xlu0 %1433
        %1436 = vset.pattern.permute.xlu0 10
        %1437 = vperm.xlu0 %1436, %v281
        %v1438 = vpop.permute.xlu0 %1437
        %1440 = vset.pattern.permute.xlu0 10
        %1441 = vperm.xlu0 %1440, %v282
        %v1442 = vpop.permute.xlu0 %1441
        %1444 = vset.pattern.permute.xlu0 10
        %1445 = vperm.xlu0 %1444, %v283
        %v1446 = vpop.permute.xlu0 %1445
        %v1448 = vadd.f32 %v1412, %v1426
        %v1449 = vadd.f32 %v1413, %v1426
        %v1450 = vadd.f32 %v1414, %v1430
        %v1451 = vadd.f32 %v1415, %v1430
        %v1452 = vadd.f32 %v1416, %v1434
        %v1453 = vadd.f32 %v1417, %v1434
        %v1454 = vadd.f32 %v1418, %v1438
        %v1455 = vadd.f32 %v1419, %v1438
        %v1456 = vadd.f32 %v1420, %v1442
        %v1457 = vadd.f32 %v1421, %v1442
        %v1458 = vadd.f32 %v1422, %v1446
        %v1459 = vadd.f32 %v1423, %v1446
        %v1460 = vxor.u32 %v1448, 2147483648
        %v1461 = vxor.u32 %v1449, 2147483648
        %v1462 = vxor.u32 %v1450, 2147483648
        %v1463 = vxor.u32 %v1451, 2147483648
        %v1464 = vxor.u32 %v1452, 2147483648
        %v1465 = vxor.u32 %v1453, 2147483648
        %v1466 = vxor.u32 %v1454, 2147483648
        %v1467 = vxor.u32 %v1455, 2147483648
        %v1468 = vxor.u32 %v1456, 2147483648
        %v1469 = vxor.u32 %v1457, 2147483648
        %v1470 = vxor.u32 %v1458, 2147483648
        %v1471 = vxor.u32 %v1459, 2147483648
        %v1472 = vmul.f32 %v1460, 1.442695
        %v1473 = vpow.pop %v1472
        %v1474 = vmul.f32 %v1461, 1.442695
        %v1475 = vpow.pop %v1474
        %v1476 = vmul.f32 %v1462, 1.442695
        %v1477 = vpow.pop %v1476
        %v1478 = vmul.f32 %v1463, 1.442695
        %v1479 = vpow.pop %v1478
        %v1480 = vmul.f32 %v1464, 1.442695
        %v1481 = vpow.pop %v1480
        %v1482 = vmul.f32 %v1465, 1.442695
        %v1483 = vpow.pop %v1482
        %v1484 = vmul.f32 %v1466, 1.442695
        %v1485 = vpow.pop %v1484
        %v1486 = vmul.f32 %v1467, 1.442695
        %v1487 = vpow.pop %v1486
        %v1488 = vmul.f32 %v1468, 1.442695
        %v1489 = vpow.pop %v1488
        %v1490 = vmul.f32 %v1469, 1.442695
        %v1491 = vpow.pop %v1490
        %v1492 = vmul.f32 %v1470, 1.442695
        %v1493 = vpow.pop %v1492
        %v1494 = vmul.f32 %v1471, 1.442695
        %v1495 = vpow.pop %v1494
        %v1496 = vadd.f32 %v1473, 1.0
        %v1497 = vadd.f32 %v1475, 1.0
        %v1498 = vadd.f32 %v1477, 1.0
        %v1499 = vadd.f32 %v1479, 1.0
        %v1500 = vadd.f32 %v1481, 1.0
        %v1501 = vadd.f32 %v1483, 1.0
        %v1502 = vadd.f32 %v1485, 1.0
        %v1503 = vadd.f32 %v1487, 1.0
        %v1504 = vadd.f32 %v1489, 1.0
        %v1505 = vadd.f32 %v1491, 1.0
        %v1506 = vadd.f32 %v1493, 1.0
        %v1507 = vadd.f32 %v1495, 1.0
        %v1508 = vrcp.pop %v1496
        %v1509 = vmul.f32 1.0, %v1508
        %v1510 = vrcp.pop %v1497
        %v1511 = vmul.f32 1.0, %v1510
        %v1512 = vrcp.pop %v1498
        %v1513 = vmul.f32 1.0, %v1512
        %v1514 = vrcp.pop %v1499
        %v1515 = vmul.f32 1.0, %v1514
        %v1516 = vrcp.pop %v1500
        %v1517 = vmul.f32 1.0, %v1516
        %v1518 = vrcp.pop %v1501
        %v1519 = vmul.f32 1.0, %v1518
        %v1520 = vrcp.pop %v1502
        %v1521 = vmul.f32 1.0, %v1520
        %v1522 = vrcp.pop %v1503
        %v1523 = vmul.f32 1.0, %v1522
        %v1524 = vrcp.pop %v1504
        %v1525 = vmul.f32 1.0, %v1524
        %v1526 = vrcp.pop %v1505
        %v1527 = vmul.f32 1.0, %v1526
        %v1528 = vrcp.pop %v1506
        %v1529 = vmul.f32 1.0, %v1528
        %v1530 = vrcp.pop %v1507
        %v1531 = vmul.f32 1.0, %v1530
        %v1532 = vmul.f32 %v1448, %v1509
        %v1533 = vmul.f32 %v1449, %v1511
        %v1534 = vmul.f32 %v1450, %v1513
        %v1535 = vmul.f32 %v1451, %v1515
        %v1536 = vmul.f32 %v1452, %v1517
        %v1537 = vmul.f32 %v1453, %v1519
        %v1538 = vmul.f32 %v1454, %v1521
        %v1539 = vmul.f32 %v1455, %v1523
        %v1540 = vmul.f32 %v1456, %v1525
        %v1541 = vmul.f32 %v1457, %v1527
        %v1542 = vmul.f32 %v1458, %v1529
        %v1543 = vmul.f32 %v1459, %v1531
        %v1544 = vadd.f32 %v1532, %v1533
        %1545 = vadd.xlane.f32.xlu0 %v1544
        %v1546 = vpop.xlane.xlu0 %1545
        %v1547 = vadd.f32 %v1534, %v1535
        %1548 = vadd.xlane.f32.xlu0 %v1547
        %v1549 = vpop.xlane.xlu0 %1548
        %v1550 = vadd.f32 %v1536, %v1537
        %1551 = vadd.xlane.f32.xlu0 %v1550
        %v1552 = vpop.xlane.xlu0 %1551
        %v1553 = vadd.f32 %v1538, %v1539
        %1554 = vadd.xlane.f32.xlu0 %v1553
        %v1555 = vpop.xlane.xlu0 %1554
        %v1556 = vadd.f32 %v1540, %v1541
        %1557 = vadd.xlane.f32.xlu0 %v1556
        %v1558 = vpop.xlane.xlu0 %1557
        %v1559 = vadd.f32 %v1542, %v1543
        %1560 = vadd.xlane.f32.xlu0 %v1559
        %v1561 = vpop.xlane.xlu0 %1560
        %v1562 = vrcp.pop 256.0
        %v1563 = vmul.f32 %v1546, %v1562
        %v1564 = vmul.f32 %v1549, %v1562
        %v1565 = vmul.f32 %v1552, %v1562
        %v1566 = vmul.f32 %v1555, %v1562
        %v1567 = vmul.f32 %v1558, %v1562
        %v1568 = vmul.f32 %v1561, %v1562
        %v1569 = vmul.f32 %v278, %v1563
        %v1570 = vmul.f32 %v279, %v1564
        %v1571 = vmul.f32 %v280, %v1565
        %v1572 = vmul.f32 %v281, %v1566
        %v1573 = vmul.f32 %v282, %v1567
        %v1574 = vmul.f32 %v283, %v1568
        %vm1575 = vcmask 113760
        %v1576 = vsel %vm1575, %v1569, 0.0
        %v1577 = vsel %vm1575, %v1570, 0.0
        %v1578 = vadd.f32 %v1576, %v1577
        %v1579 = vsel %vm1575, %v1571, 0.0
        %v1580 = vadd.f32 %v1578, %v1579
        %v1581 = vsel %vm1575, %v1572, 0.0
        %v1582 = vadd.f32 %v1580, %v1581
        %v1583 = vsel %vm1575, %v1573, 0.0
        %v1584 = vadd.f32 %v1582, %v1583
        %v1585 = vsel %vm1575, %v1574, 0.0
        %v1586 = vadd.f32 %v1584, %v1585
        %v1587 = vrot.slane %v1586, 4
        %v1588 = vadd.f32 %v1586, %v1587
        %v1589 = vrot.slane %v1588, 2
        %v1590 = vadd.f32 %v1588, %v1589
        %v1591 = vrot.slane %v1590, 1
        %v1592 = vadd.f32 %v1590, %v1591
        %v1594 = vlaneseq
        %v1595 = vshrl.u32 %v1594, 7
        %v1596 = vsub.s32 0, %v1595
        %v1597 = vrot.slane %v290, %v1596
        %1598 = vrot.lane.b32.xlu0 %v1597, 12
        %v1599 = vpop.permute.xlu0 %1598
        %v1601 = vadd.f32 %v1592, %v1599
        %v1602 = vxor.u32 %v1601, 2147483648
        %v1603 = vmul.f32 %v1602, 1.442695
        %v1604 = vpow.pop %v1603
        %v1605 = vadd.f32 %v1604, 1.0
        %v1606 = vrcp.pop %v1605
        %v1607 = vmul.f32 1.0, %v1606
        %v1608 = vmul.f32 %v1601, %v1607
        %v1609 = vlaneseq
        %v1610 = vshrl.u32 %v1609, 7
        %v1611 = vsub.s32 0, %v1610
        %v1612 = vrot.slane %v1608, %v1611
        %1614 = vrot.lane.b32.xlu0 %v1612, 2
        %v1615 = vpop.permute.xlu0 %1614
        %v1617 = vmul.f32 %v278, %v1615
        %v1618 = vmul.f32 %v279, %v1615
        %v1619 = vmul.f32 %v280, %v1615
        %v1620 = vmul.f32 %v281, %v1615
        %v1621 = vmul.f32 %v282, %v1615
        %v1622 = vmul.f32 %v283, %v1615
        %1629 = vrot.lane.b32.xlu0 %v1617, 114
        %v1630 = vpop.permute.xlu0 %1629
        %1631 = vrot.lane.b32.xlu0 %v1618, 114
        %v1632 = vpop.permute.xlu0 %1631
        %1633 = vrot.lane.b32.xlu0 %v1619, 114
        %v1634 = vpop.permute.xlu0 %1633
        %1635 = vrot.lane.b32.xlu0 %v1620, 114
        %v1636 = vpop.permute.xlu0 %1635
        %1637 = vrot.lane.b32.xlu0 %v1621, 114
        %v1638 = vpop.permute.xlu0 %1637
        %1639 = vrot.lane.b32.xlu0 %v1622, 114
        %v1640 = vpop.permute.xlu0 %1639
        %vm1647 = vcmask 15360
        %v1648 = vsel %vm1647, %v1630, 0.0
        %1649 = vadd.xlane.f32.xlu0 %v1648
        %v1650 = vpop.xlane.xlu0 %1649
        %v1651 = vsel %vm1647, %v1632, 0.0
        %1652 = vadd.xlane.f32.xlu0 %v1651
        %v1653 = vpop.xlane.xlu0 %1652
        %v1654 = vsel %vm1647, %v1634, 0.0
        %1655 = vadd.xlane.f32.xlu0 %v1654
        %v1656 = vpop.xlane.xlu0 %1655
        %v1657 = vsel %vm1647, %v1636, 0.0
        %1658 = vadd.xlane.f32.xlu0 %v1657
        %v1659 = vpop.xlane.xlu0 %1658
        %v1660 = vsel %vm1647, %v1638, 0.0
        %1661 = vadd.xlane.f32.xlu0 %v1660
        %v1662 = vpop.xlane.xlu0 %1661
        %v1663 = vsel %vm1647, %v1640, 0.0
        %1664 = vadd.xlane.f32.xlu0 %v1663
        %v1665 = vpop.xlane.xlu0 %1664
        %v1666 = vadd.f32 %v1650, %v278
        %v1667 = vadd.f32 %v1653, %v279
        %v1668 = vadd.f32 %v1656, %v280
        %v1669 = vadd.f32 %v1659, %v281
        %v1670 = vadd.f32 %v1662, %v282
        %v1671 = vadd.f32 %v1665, %v283
        %v1672 = vxor.u32 %v1666, 2147483648
        %v1673 = vxor.u32 %v1667, 2147483648
        %v1674 = vxor.u32 %v1668, 2147483648
        %v1675 = vxor.u32 %v1669, 2147483648
        %v1676 = vxor.u32 %v1670, 2147483648
        %v1677 = vxor.u32 %v1671, 2147483648
        %v1678 = vmul.f32 %v1672, 1.442695
        %v1679 = vpow.pop %v1678
        %v1680 = vmul.f32 %v1673, 1.442695
        %v1681 = vpow.pop %v1680
        %v1682 = vmul.f32 %v1674, 1.442695
        %v1683 = vpow.pop %v1682
        %v1684 = vmul.f32 %v1675, 1.442695
        %v1685 = vpow.pop %v1684
        %v1686 = vmul.f32 %v1676, 1.442695
        %v1687 = vpow.pop %v1686
        %v1688 = vmul.f32 %v1677, 1.442695
        %v1689 = vpow.pop %v1688
        %v1690 = vadd.f32 %v1679, 1.0
        %v1691 = vadd.f32 %v1681, 1.0
        %v1692 = vadd.f32 %v1683, 1.0
        %v1693 = vadd.f32 %v1685, 1.0
        %v1694 = vadd.f32 %v1687, 1.0
        %v1695 = vadd.f32 %v1689, 1.0
        %v1696 = vrcp.pop %v1690
        %v1697 = vmul.f32 1.0, %v1696
        %v1698 = vrcp.pop %v1691
        %v1699 = vmul.f32 1.0, %v1698
        %v1700 = vrcp.pop %v1692
        %v1701 = vmul.f32 1.0, %v1700
        %v1702 = vrcp.pop %v1693
        %v1703 = vmul.f32 1.0, %v1702
        %v1704 = vrcp.pop %v1694
        %v1705 = vmul.f32 1.0, %v1704
        %v1706 = vrcp.pop %v1695
        %v1707 = vmul.f32 1.0, %v1706
        %1709 = vset.pattern.permute.xlu0 11
        %1710 = vperm.xlu0 %1709, %v1697
        %v1711 = vpop.permute.xlu0 %1710
        %1714 = vset.pattern.permute.xlu0 11
        %1715 = vperm.xlu0 %1714, %v1699
        %v1716 = vpop.permute.xlu0 %1715
        %1719 = vset.pattern.permute.xlu0 11
        %1720 = vperm.xlu0 %1719, %v1701
        %v1721 = vpop.permute.xlu0 %1720
        %1724 = vset.pattern.permute.xlu0 11
        %1725 = vperm.xlu0 %1724, %v1703
        %v1726 = vpop.permute.xlu0 %1725
        %1729 = vset.pattern.permute.xlu0 11
        %1730 = vperm.xlu0 %1729, %v1705
        %v1731 = vpop.permute.xlu0 %1730
        %1734 = vset.pattern.permute.xlu0 11
        %1735 = vperm.xlu0 %1734, %v1707
        %v1736 = vpop.permute.xlu0 %1735
        %v1738 = vmul.f32 %v1532, %v1711
        %v1739 = vmul.f32 %v1533, %v1711
        %v1740 = vmul.f32 %v1534, %v1716
        %v1741 = vmul.f32 %v1535, %v1716
        %v1742 = vmul.f32 %v1536, %v1721
        %v1743 = vmul.f32 %v1537, %v1721
        %v1744 = vmul.f32 %v1538, %v1726
        %v1745 = vmul.f32 %v1539, %v1726
        %v1746 = vmul.f32 %v1540, %v1731
        %v1747 = vmul.f32 %v1541, %v1731
        %v1748 = vmul.f32 %v1542, %v1736
        %v1749 = vmul.f32 %v1543, %v1736
        %1751 = vset.pattern.permute.xlu0 0
        %1752 = vperm.xlu0 %1751, %v292
        %v1753 = vpop.permute.xlu0 %1752
        %vm1755 = vcmask 392192
        %v1757 = vsel %vm1755, %v291, 0
        %1759 = vmatprep.subr.mxu0 0.0
        %1760 = vmatpush1.msra.mxu0 0.0
        %1761 = vmatprep.subr.mxu0 0.0
        %1762 = vmatpush1.msra.mxu0 0.0
        %1763 = vmatprep.subr.mxu0 0.0
        %1764 = vmatpush1.msra.mxu0 0.0
        %1765 = vmatprep.subr.mxu0 0.0
        %1766 = vmatpush1.msra.mxu0 0.0
        %1767 = vmatprep.subr.mxu0 0.0
        %1768 = vmatpush1.msra.mxu0 0.0
        %1769 = vmatprep.subr.mxu0 0.0
        %1770 = vmatpush1.msra.mxu0 0.0
        %1771 = vmatprep.subr.mxu0 0.0
        %1772 = vmatpush1.msra.mxu0 0.0
        %1773 = vmatprep.subr.mxu0 0.0
        %1774 = vmatpush1.msra.mxu0 0.0
        %1775 = vmatprep.subr.mxu0 0.0
        %1776 = vmatpush1.msra.mxu0 0.0
        %1777 = vmatprep.subr.mxu0 0.0
        %1778 = vmatpush1.msra.mxu0 0.0
        %1779 = vmatprep.subr.mxu0 %v1749
        %1780 = vmatpush1.msra.mxu0 %v1748
        %1781 = vmatprep.subr.mxu0 %v1747
        %1782 = vmatpush1.msra.mxu0 %v1746
        %1783 = vmatprep.subr.mxu0 %v1745
        %1784 = vmatpush1.msra.mxu0 %v1744
        %1785 = vmatprep.subr.mxu0 %v1743
        %1786 = vmatpush1.msra.mxu0 %v1742
        %1787 = vmatprep.subr.mxu0 %v1741
        %1788 = vmatpush1.msra.mxu0 %v1740
        %1789 = vmatprep.subr.mxu0 %v1739
        %1790 = vmatpush1.msra.mxu0 %v1738
        %1791 = vmatprep.subr.mxu0 0.0
        %1792 = vmatpush2.msra.mxu0 0.0
        %1793 = vmatprep.subr.mxu0 0.0
        %1794 = vmatpush2.msra.mxu0 0.0
        %1795 = vmatprep.subr.mxu0 0.0
        %1796 = vmatpush2.msra.mxu0 0.0
        %1797 = vmatprep.subr.mxu0 0.0
        %1798 = vmatpush2.msra.mxu0 0.0
        %1799 = vmatprep.subr.mxu0 0.0
        %1800 = vmatpush2.msra.mxu0 0.0
        %1801 = vmatprep.subr.mxu0 0.0
        %1802 = vmatpush2.msra.mxu0 0.0
        %1803 = vmatprep.subr.mxu0 0.0
        %1804 = vmatpush2.msra.mxu0 0.0
        %1805 = vmatprep.subr.mxu0 0.0
        %1806 = vmatpush2.msra.mxu0 0.0
        %1807 = vmatprep.subr.mxu0 0.0
        %1808 = vmatpush2.msra.mxu0 0.0
        %1809 = vmatprep.subr.mxu0 0.0
        %1810 = vmatpush2.msra.mxu0 0.0
        %1811 = vmatprep.subr.mxu0 0.0
        %1812 = vmatpush2.msra.mxu0 0.0
        %1813 = vmatprep.subr.mxu0 0.0
        %1814 = vmatpush2.msra.mxu0 0.0
        %1815 = vmatprep.subr.mxu0 0.0
        %1816 = vmatpush2.msra.mxu0 0.0
        %1817 = vmatprep.subr.mxu0 0.0
        %1818 = vmatpush2.msra.mxu0 0.0
        %1819 = vmatprep.subr.mxu0 0.0
        %1820 = vmatpush2.msra.mxu0 0.0
        %1821 = vmatprep.subr.mxu0 0.0
        %1822 = vmatpush2.msra.mxu0 0.0
        %1823 = vmatprep.mubr.f32.mxu0 0.0
        %1824 = vmatmul.mubr.f32.gmra.mxu0 %v1757
        %v1825 = vpop.f32.mrf.mxu0
        %v1826 = vadd.f32 %v1753, %v1825
        %v1827 = vpop.f32.mrf.mxu0
        %v1828 = vadd.f32 %v1753, %v1827
        %1829 = vdwg.mxu0
        %v1830 = vadd.f32 %v1826, %v293
        %v1831 = vadd.f32 %v1828, %v294
        %1832 = vst [vmem:[%s271] sm:$0xff] %v1830
        %1833 = vst [vmem:[%s271 + $0x8] sm:$0xff] %v1831
        %s1834 = sand.u32 %s181, 1
        %s1835 = scalar_lea.sflag [#allocation3], %s1834
        %s1836 = sand.u32 %s181, 1
        %s1837 = smul.addr %s1836, 16
        %s1838 = scalar_lea.vmem [#allocation2], %s1837
        // Predicated region
        $region49: #{tpu_custom_call.1} parent=47 // pred_check
          %p1839 = pneg %p191
        $region50: #{tpu_custom_call.1} parent=47 // pred_check_branch
          %1841 = sbr.rel (%p1839) target = $region52
        $region51: #{tpu_custom_call.1} parent=47 // pred_region
          %s1843 = ssub.s32 256, 256
          %1844 = vsyncadd %s1835, %s1843
          %s1845 = smul.addr %s21, 2
          %s1846 = smul.addr %s1845, 128
          %s1847 = scalar_lea.hbm %s7, %s1846
          %s1849 = sshll.u32 %s1838, 4
          %s1850 = int_to_ptr.vmem [resolvable:$true] %s1849
          %1852 = dma.vmem_to_hbm [thread:$0]  %s1850, 256, %s1847, %s1835
        $region52: #{tpu_custom_call.1} parent=47 // pred_fallthru
          _
      $region48: #{tpu_custom_call.1} parent=5 // pred_fallthru
        _
      %p1853 = scmp.le.s32.totalorder 2, %s16
      // Predicated region
      $region53: #{tpu_custom_call.1} parent=5 // pred_check
        %p1854 = pneg %p1853
      $region54: #{tpu_custom_call.1} parent=5 // pred_check_branch
        %1856 = sbr.rel (%p1854) target = $region56
      $region55: #{tpu_custom_call.1} parent=5 // pred_region
        %s1857 = ssub.s32 %s16, 2
        // Predicated region
        $region57: #{tpu_custom_call.1} parent=55 // pred_check
          %p1858 = pneg %p197
        $region58: #{tpu_custom_call.1} parent=55 // pred_check_branch
          %1860 = sbr.rel (%p1858) target = $region60
        $region59: #{tpu_custom_call.1} parent=55 // pred_region
          %s1861 = sand.u32 %s182, 1
          %s1862 = scalar_lea.sflag [#allocation3], %s1861
          %s1863 = sand.u32 %s182, 1
          %s1864 = smul.addr %s1863, 16
          %s1865 = scalar_lea.vmem [#allocation2], %s1864
          %1866 = dma.done %s1862, 256
        $region60: #{tpu_custom_call.1} parent=55 // pred_fallthru
          _
      $region56: #{tpu_custom_call.1} parent=5 // pred_fallthru
        _
    $region6: #{tpu_custom_call.1} parent=1 // loop_footer
      %s20 = sadd.s32 1, %s16
    $region7: #{tpu_custom_call.1} parent=1 // loop_footer_branch
      %15 = sbr.rel target = $region3
    $region8: #{tpu_custom_call.1} parent=1 // loop_exit
      _
    %1867 = vsyncpa [#allocation3], 1
    %s1868 = scalar_lea.sflag [#allocation3], 1
    %1869 = vsyncpa %s1868, 1

</llo_original>
